<compile_context>
chip_gen: v5e
topology: v5e:2x2
jax: 0.10.0
libtpu: 0.0.40
codegen_flags: <defaults>
</compile_context>

<pallas_src>
import functools

import jax
import jax.numpy as jnp
from jax.experimental import pallas as pl
from jax.experimental.pallas import tpu as pltpu

BN_EPS = 1e-5
LANE = 128
SUBLANE = 8


def _round_up(x, m):
    return (x + m - 1) // m * m


def _vmem_physical_bytes():
    """Physical VMEM per TensorCore; conservative 64 MiB (v7x) fallback."""
    try:
        info = pltpu.get_tpu_info()
        for attr in ("vmem_capacity_bytes", "vmem_size_bytes", "vmem_bytes"):
            v = getattr(info, attr, None)
            if v:
                return int(v)
    except Exception:
        pass
    return 64 * 1024 * 1024


def _vmem_budget_bytes():
    # ~48 MiB on v7x (64 MiB physical), ~96 MiB on v5e/v6e (128 MiB physical).
    return min(_vmem_physical_bytes() * 3 // 4, 100 * 1024 * 1024)


def _pick_tiles(n_pad, hidden, budget):
    """Row tile tm and reduction tile tk for the tiled (large-graph) path."""
    tm = 128
    for t in (512, 256, 128):
        if n_pad % t == 0:
            tm = t
            break

    def vmem_need(tk):
        return (2 * tm * tk * 2            # A_hat tiles, double-buffered (bf16)
                + n_pad * hidden * 2       # VMEM-resident XW (bf16, fetched once)
                + tm * hidden * 4          # f32 accumulator
                + 4 * tm * hidden * 2)     # in/out h tiles, double-buffered

    tk = n_pad                             # whole-K when it fits: trivial k axis
    if vmem_need(tk) > budget * 0.8:
        tk = tm
        for cand in (8192, 4096, 2048, 1024, 512, 256, 128):
            if n_pad % cand == 0 and vmem_need(cand) <= budget * 0.8:
                tk = cand
                break
    return tm, tk


# ----------------------------------------------------------------------------
# Pallas kernels
# ----------------------------------------------------------------------------
def fused_gcn_kernel(a_ref, h0_ref, wc_ref, bc_ref, scale_ref, shift_ref,
                     p_ref, wl_ref, bl_ref, o_ref, *, num_layers):
    """All GCNConv layers + global_mean_pool + Linear in a single call.

    A_hat is read from HBM exactly once and stays VMEM-resident for every layer;
    h / XW are tiny (N x 128). Used whenever the dense A_hat fits the VMEM budget.
    """
    a = a_ref[...]                       # (n_pad, n_pad) bf16, resident
    h = h0_ref[...]                      # (n_pad, hidden) bf16
    for l in range(num_layers):
        xw = jnp.dot(h, wc_ref[l],
                     preferred_element_type=jnp.float32).astype(jnp.bfloat16)
        hf = jnp.dot(a, xw, preferred_element_type=jnp.float32) + bc_ref[l]
        if l < num_layers - 1:
            hf = hf * scale_ref[l] + shift_ref[l]   # folded BatchNorm1d (running stats)
            hf = jnp.maximum(hf, 0.0)               # ReLU; dropout = identity in eval
        h = hf.astype(jnp.bfloat16)
    pooled = jnp.dot(p_ref[...], h, preferred_element_type=jnp.float32)
    o_ref[...] = (jnp.dot(pooled.astype(jnp.bfloat16), wl_ref[...],
                          preferred_element_type=jnp.float32) + bl_ref[...])


def xw_kernel(x_ref, w_ref, o_ref):
    """Per-layer feature transform XW = X @ W (bf16 in, f32 accumulate, bf16 out)."""
    o_ref[...] = jnp.dot(x_ref[...], w_ref[...],
                         preferred_element_type=jnp.float32).astype(o_ref.dtype)


def gcn_prop_kernel(a_ref, xw_ref, b_ref, scale_ref, shift_ref, o_ref, acc_ref,
                    *, tk, apply_bn_relu):
    """One GCNConv layer: rows of A_hat @ XW + b (+ folded BN + ReLU).

    XW is a full-extent VMEM-resident block (constant index map); the current
    (tk, hidden) slab is sliced in-kernel, so only A_hat streams from HBM.
    """
    k = pl.program_id(1)
    start = pl.multiple_of(k * tk, tk)
    part = jnp.dot(a_ref[...], xw_ref[pl.ds(start, tk), :],
                   preferred_element_type=jnp.float32)

    @pl.when(k == 0)
    def _first():
        acc_ref[...] = part              # write, not zero-fill + read-modify-write

    @pl.when(k > 0)
    def _accum():
        acc_ref[...] += part

    @pl.when(k == pl.num_programs(1) - 1)
    def _finalize():
        h = acc_ref[...] + b_ref[...]
        if apply_bn_relu:
            h = h * scale_ref[...] + shift_ref[...]
            h = jnp.maximum(h, 0.0)
        o_ref[...] = h.astype(o_ref.dtype)


def pool_linear_kernel(p_ref, h_ref, wl_ref, bl_ref, o_ref, pooled_ref):
    """global_mean_pool + final Linear; node rows are the reduction axis."""
    i = pl.program_id(0)
    part = jnp.dot(p_ref[...], h_ref[...], preferred_element_type=jnp.float32)

    @pl.when(i == 0)
    def _first():
        pooled_ref[...] = part

    @pl.when(i > 0)
    def _accum():
        pooled_ref[...] += part

    @pl.when(i == pl.num_programs(0) - 1)
    def _linear():
        o_ref[...] = (jnp.dot(pooled_ref[...].astype(jnp.bfloat16), wl_ref[...],
                              preferred_element_type=jnp.float32) + bl_ref[...])


# ----------------------------------------------------------------------------
# pallas_call wrappers
# ----------------------------------------------------------------------------
def fused_gcn_call(a_hat, h0, wc, bc, scale, shift, p, wl, bl, num_layers,
                   g_pad, out_pad, vmem_limit):
    kernel = functools.partial(fused_gcn_kernel, num_layers=num_layers)
    return pl.pallas_call(
        kernel,
        out_shape=jax.ShapeDtypeStruct((g_pad, out_pad), jnp.float32),
        compiler_params=pltpu.CompilerParams(vmem_limit_bytes=vmem_limit),
    )(a_hat, h0, wc, bc, scale, shift, p, wl, bl)


def matmul_xw(h_bf16, w_bf16, tm, vmem_limit):
    n_pad, hidden = h_bf16.shape
    return pl.pallas_call(
        xw_kernel,
        out_shape=jax.ShapeDtypeStruct((n_pad, hidden), jnp.bfloat16),
        grid_spec=pltpu.PrefetchScalarGridSpec(
            num_scalar_prefetch=0, grid=(n_pad // tm,),
            in_specs=[pl.BlockSpec((tm, hidden), lambda i: (i, 0)),
                      pl.BlockSpec((hidden, hidden), lambda i: (0, 0))],
            out_specs=pl.BlockSpec((tm, hidden), lambda i: (i, 0))),
        compiler_params=pltpu.CompilerParams(
            dimension_semantics=("parallel",),
            vmem_limit_bytes=vmem_limit),
    )(h_bf16, w_bf16)


def gcn_conv_layer(a_hat, xw, b, scale, shift, tm, tk, vmem_limit, apply_bn_relu):
    n_pad = a_hat.shape[0]
    hidden = xw.shape[1]
    kernel = functools.partial(gcn_prop_kernel, tk=tk, apply_bn_relu=apply_bn_relu)
    return pl.pallas_call(
        kernel,
        out_shape=jax.ShapeDtypeStruct((n_pad, hidden), jnp.bfloat16),
        grid_spec=pltpu.PrefetchScalarGridSpec(
            num_scalar_prefetch=0, grid=(n_pad // tm, n_pad // tk),
            in_specs=[pl.BlockSpec((tm, tk), lambda i, k: (i, k)),         # A_hat tile
                      pl.BlockSpec((n_pad, hidden), lambda i, k: (0, 0)),  # resident XW
                      pl.BlockSpec((1, hidden), lambda i, k: (0, 0)),      # bias
                      pl.BlockSpec((1, hidden), lambda i, k: (0, 0)),      # BN scale
                      pl.BlockSpec((1, hidden), lambda i, k: (0, 0))],     # BN shift
            out_specs=pl.BlockSpec((tm, hidden), lambda i, k: (i, 0)),
            scratch_shapes=[pltpu.VMEM((tm, hidden), jnp.float32)]),
        compiler_params=pltpu.CompilerParams(
            # row tiles shard across the 2 TCs on v7x; no-op on v5e/v6e
            dimension_semantics=("parallel", "arbitrary"),
            vmem_limit_bytes=vmem_limit),
    )(a_hat, xw, b, scale, shift)


def pool_linear(p_bf16, h_bf16, wl_bf16, bl, tm, vmem_limit):
    g_pad, n_pad = p_bf16.shape
    hidden = h_bf16.shape[1]
    out_pad = wl_bf16.shape[1]
    return pl.pallas_call(
        pool_linear_kernel,
        out_shape=jax.ShapeDtypeStruct((g_pad, out_pad), jnp.float32),
        grid_spec=pltpu.PrefetchScalarGridSpec(
            num_scalar_prefetch=0, grid=(n_pad // tm,),
            in_specs=[pl.BlockSpec((g_pad, tm), lambda i: (0, i)),         # pool matrix
                      pl.BlockSpec((tm, hidden), lambda i: (i, 0)),        # h_last
                      pl.BlockSpec((hidden, out_pad), lambda i: (0, 0)),   # lin W
                      pl.BlockSpec((1, out_pad), lambda i: (0, 0))],       # lin b
            out_specs=pl.BlockSpec((g_pad, out_pad), lambda i: (0, 0)),
            scratch_shapes=[pltpu.VMEM((g_pad, hidden), jnp.float32)]),
        compiler_params=pltpu.CompilerParams(
            # pooled accumulator spans the row axis -> must stay "arbitrary"
            dimension_semantics=("arbitrary",),
            vmem_limit_bytes=vmem_limit),
    )(p_bf16, h_bf16, wl_bf16, bl)


# ----------------------------------------------------------------------------
# Glue (embedding gather, graph preprocessing, BN folding) in plain JAX
# ----------------------------------------------------------------------------
def atom_encoder(x_int, emb_tables):
    """AtomEncoder: sum of per-feature embedding lookups. (Gather stays in JAX.)"""
    n = x_int.shape[0]
    hidden = emb_tables[0].shape[1]
    embed = jnp.zeros((n, hidden), jnp.float32)
    for f, tbl in enumerate(emb_tables):
        embed = embed + jnp.take(tbl, x_int[:, f], axis=0)
    return embed


def build_normalized_adjacency(edge_index, num_nodes):
    """Dense GCN propagation matrix, PyG gcn_norm style (f32, unpadded).

    Directed scatter-add of edges (duplicates add), add_remaining_self_loops
    (existing self loops are not double counted), D^{-1/2} A D^{-1/2}.
    """
    src, dst = edge_index[0], edge_index[1]
    a = jnp.zeros((num_nodes, num_nodes), jnp.float32)
    a = a.at[dst, src].add(1.0)                       # message src -> dst
    has_self = jnp.diag(a) > 0
    a = a + jnp.diag(jnp.where(has_self, 0.0, 1.0))   # add remaining self loops
    deg = jnp.sum(a, axis=1)
    d_inv_sqrt = jax.lax.rsqrt(jnp.maximum(deg, 1e-12))
    return a * d_inv_sqrt[:, None] * d_inv_sqrt[None, :]


def build_mean_pool_matrix(batch, num_graphs):
    """P[g, n] = 1/|graph g| if node n belongs to graph g else 0 (f32, unpadded)."""
    onehot = (batch[None, :] == jnp.arange(num_graphs)[:, None]).astype(jnp.float32)
    # empty graph -> 0 (PyTorch global_mean_pool would give NaN); benign difference
    counts = jnp.maximum(jnp.sum(onehot, axis=1, keepdims=True), 1.0)
    return onehot / counts


def _fold_bn(params, layer):
    scale = params["bn_gamma"][layer] * jax.lax.rsqrt(params["bn_var"][layer] + BN_EPS)
    shift = params["bn_beta"][layer] - params["bn_mean"][layer] * scale
    return scale, shift


def gcn_graph_forward(params, x_int, edge_index, batch, num_graphs,
                      force_tiled=False):
    num_nodes = x_int.shape[0]
    hidden = params["emb_tables"][0].shape[1]
    out_dim = params["lin_w"].shape[1]
    num_layers = len(params["conv_w"])

    n_pad = _round_up(num_nodes, 256)
    if n_pad > 512:
        n_pad = _round_up(n_pad, 512)
    g_pad = _round_up(num_graphs, SUBLANE)
    out_pad = _round_up(out_dim, LANE)
    budget = _vmem_budget_bytes()

    # Graph-structure tensors depend only on edge_index/batch: cacheable across calls.
    # TODO(synk): for large sparse graphs replace the dense [N,N] A_hat with a
    # scalar-prefetch neighbor-list gather (PrefetchScalarGridSpec).
    a_f32 = build_normalized_adjacency(edge_index, num_nodes)
    a_hat = jnp.pad(a_f32, ((0, n_pad - num_nodes), (0, n_pad - num_nodes))
                    ).astype(jnp.bfloat16)
    p = jnp.pad(build_mean_pool_matrix(batch, num_graphs),
                ((0, g_pad - num_graphs), (0, n_pad - num_nodes))
                ).astype(jnp.bfloat16)

    # AtomEncoder (embedding gather kept in plain JAX), padded + cast to bf16.
    # NOTE: padded node rows become nonzero after bias/BN inside the kernels; this is
    # harmless because A_hat and P have zero *columns* for padded node indices.
    h0 = atom_encoder(x_int, params["emb_tables"])
    h0 = jnp.pad(h0, ((0, n_pad - num_nodes), (0, 0))).astype(jnp.bfloat16)

    wl = jnp.pad(params["lin_w"], ((0, 0), (0, out_pad - out_dim))).astype(jnp.bfloat16)
    bl = jnp.pad(params["lin_b"], ((0, 0), (0, out_pad - out_dim)))

    scales, shifts = [], []
    for l in range(num_layers - 1):
        sc, sh = _fold_bn(params, l)
        scales.append(sc)
        shifts.append(sh)

    # Fused path fit estimate: resident A_hat + generous slack for h/XW temporaries.
    fused_need = (n_pad * n_pad * 2 + 8 * n_pad * hidden * 4
                  + num_layers * hidden * hidden * 2 + g_pad * n_pad * 2
                  + hidden * out_pad * 2 + (2 << 20))
    use_fused = (not force_tiled) and fused_need <= budget * 0.7

    if use_fused:
        wc = jnp.stack([w.astype(jnp.bfloat16) for w in params["conv_w"]])
        bc = jnp.stack(params["conv_b"])
        if scales:
            sc_stack = jnp.stack(scales)
            sh_stack = jnp.stack(shifts)
        else:
            sc_stack = jnp.ones((1, 1, hidden), jnp.float32)
            sh_stack = jnp.zeros((1, 1, hidden), jnp.float32)
        out_full = fused_gcn_call(a_hat, h0, wc, bc, sc_stack, sh_stack, p, wl, bl,
                                  num_layers, g_pad, out_pad, budget)
    else:
        tm, tk = _pick_tiles(n_pad, hidden, budget)
        h = h0
        for l in range(num_layers):
            last = (l == num_layers - 1)
            w = params["conv_w"][l].astype(jnp.bfloat16)
            xw = matmul_xw(h, w, tm, budget)        # hoisted X @ W, once per layer
            sc = scales[l] if not last else jnp.ones((1, hidden), jnp.float32)
            sh = shifts[l] if not last else jnp.zeros((1, hidden), jnp.float32)
            h = gcn_conv_layer(a_hat, xw, params["conv_b"][l], sc, sh,
                               tm, tk, budget, apply_bn_relu=not last)
        out_full = pool_linear(p, h, wl, bl, tm, budget)

    return out_full[:num_graphs, :out_dim]


# ----------------------------------------------------------------------------
# Pure-JAX (f32) reference of the same forward pass, for validation
# ----------------------------------------------------------------------------
def reference_forward(params, x_int, edge_index, batch, num_graphs):
    num_nodes = x_int.shape[0]
    a = build_normalized_adjacency(edge_index, num_nodes)
    h = atom_encoder(x_int, params["emb_tables"])
    num_layers = len(params["conv_w"])
    for l in range(num_layers - 1):
        h = a @ (h @ params["conv_w"][l]) + params["conv_b"][l]
        sc, sh = _fold_bn(params, l)
        h = jnp.maximum(h * sc + sh, 0.0)
    h = a @ (h @ params["conv_w"][-1]) + params["conv_b"][-1]
    onehot = (batch[None, :] == jnp.arange(num_graphs)[:, None]).astype(jnp.float32)
    pooled = (onehot @ h) / jnp.maximum(onehot.sum(axis=1, keepdims=True), 1.0)
    return pooled @ params["lin_w"] + params["lin_b"]


# ----------------------------------------------------------------------------
# Deterministic parameter initialization (synthetic, not a checkpoint load)
# ----------------------------------------------------------------------------
def init_params(key, hidden_dim, output_dim, num_layers, vocab_sizes):
    keys = iter(jax.random.split(key, 6 * num_layers + len(vocab_sizes) + 4))
    params = {
        "emb_tables": [0.1 * jax.random.normal(next(keys), (v, hidden_dim), jnp.float32)
                       for v in vocab_sizes],
        "conv_w": [], "conv_b": [],
        "bn_gamma": [], "bn_beta": [], "bn_mean": [], "bn_var": [],
    }
    for layer in range(num_layers):
        params["conv_w"].append(
            0.1 * jax.random.normal(next(keys), (hidden_dim, hidden_dim), jnp.float32))
        params["conv_b"].append(
            0.01 * jax.random.normal(next(keys), (1, hidden_dim), jnp.float32))
        if layer < num_layers - 1:
            params["bn_gamma"].append(
                1.0 + 0.1 * jax.random.normal(next(keys), (1, hidden_dim), jnp.float32))
            params["bn_beta"].append(
                0.1 * jax.random.normal(next(keys), (1, hidden_dim), jnp.float32))
            params["bn_mean"].append(
                0.05 * jax.random.normal(next(keys), (1, hidden_dim), jnp.float32))
            params["bn_var"].append(
                jax.random.uniform(next(keys), (1, hidden_dim), jnp.float32, 0.5, 1.5))
    params["lin_w"] = 0.1 * jax.random.normal(next(keys), (hidden_dim, output_dim),
                                              jnp.float32)
    params["lin_b"] = jnp.zeros((1, output_dim), jnp.float32)
    return params


if __name__ == "__main__":
    HIDDEN = 128      # hidden_dim (lane-aligned)
    OUT_DIM = 1       # output_dim
    NUM_LAYERS = 3    # num_layers (small but multi-layer)
    NUM_NODES = 16    # 2 graphs x 8 nodes
    NUM_GRAPHS = 2
    VOCABS = [10, 5, 7]   # three categorical atom features

    key = jax.random.PRNGKey(0)
    k_param, k_feat = jax.random.split(key)
    params = init_params(k_param, HIDDEN, OUT_DIM, NUM_LAYERS, VOCABS)

    # Node features: integer categorical atom features, [N, F].
    x_int = jnp.stack(
        [jax.random.randint(jax.random.fold_in(k_feat, f), (NUM_NODES,), 0, v)
         for f, v in enumerate(VOCABS)], axis=1).astype(jnp.int32)

    # Two ring graphs; store both edge directions (PyG-style undirected storage).
    edges = []
    for g in range(NUM_GRAPHS):
        base = g * 8
        for i in range(8):
            u, v = base + i, base + (i + 1) % 8
            edges.append((u, v))
            edges.append((v, u))
    edge_index = jnp.array(edges, dtype=jnp.int32).T               # [2, E]
    batch = jnp.repeat(jnp.arange(NUM_GRAPHS, dtype=jnp.int32), 8)  # [N]

    ref = reference_forward(params, x_int, edge_index, batch, NUM_GRAPHS)

    out_fused = gcn_graph_forward(params, x_int, edge_index, batch, NUM_GRAPHS)
    out_fused = jax.block_until_ready(out_fused)
    out_tiled = gcn_graph_forward(params, x_int, edge_index, batch, NUM_GRAPHS,
                                  force_tiled=True)
    out_tiled = jax.block_until_ready(out_tiled)

    assert out_fused.shape == (NUM_GRAPHS, OUT_DIM)
    assert out_tiled.shape == (NUM_GRAPHS, OUT_DIM)
    assert bool(jnp.all(jnp.isfinite(out_fused)))
    assert bool(jnp.all(jnp.isfinite(out_tiled)))
    denom = float(jnp.max(jnp.abs(ref))) + 1e-6
    err_fused = float(jnp.max(jnp.abs(out_fused - ref))) / denom
    err_tiled = float(jnp.max(jnp.abs(out_tiled - ref))) / denom
    # bf16 operands with f32 accumulation: allow a few % drift vs the f32 reference.
    assert err_fused < 0.1 and err_tiled < 0.1, (err_fused, err_tiled)
    print("KERNEL_OK")
</pallas_src>

<mosaic_0001>
module attributes {stable_mosaic.version = 11 : i64} {
  func.func @fused_gcn_kernel(%arg0: memref<256x256xbf16, #tpu.memory_space<vmem>>, %arg1: memref<256x128xbf16, #tpu.memory_space<vmem>>, %arg2: memref<3x128x128xbf16, #tpu.memory_space<vmem>>, %arg3: memref<3x1x128xf32, #tpu.memory_space<vmem>>, %arg4: memref<2x1x128xf32, #tpu.memory_space<vmem>>, %arg5: memref<2x1x128xf32, #tpu.memory_space<vmem>>, %arg6: memref<8x256xbf16, #tpu.memory_space<vmem>>, %arg7: memref<128x128xbf16, #tpu.memory_space<vmem>>, %arg8: memref<1x128xf32, #tpu.memory_space<vmem>>, %arg9: memref<8x128xf32, #tpu.memory_space<vmem>>) attributes {dimension_semantics = [], scalar_prefetch = 0 : i64, scratch_operands = 0 : i64, tpu.core_type = #tpu.core_type<tc>} {
    %c0 = arith.constant 0 : index
    %c0_0 = arith.constant 0 : index
    %0 = vector.load %arg0[%c0, %c0_0] : memref<256x256xbf16, #tpu.memory_space<vmem>>, vector<256x256xbf16>
    %c0_1 = arith.constant 0 : index
    %c0_2 = arith.constant 0 : index
    %1 = vector.load %arg1[%c0_1, %c0_2] : memref<256x128xbf16, #tpu.memory_space<vmem>>, vector<256x128xbf16>
    %c0_3 = arith.constant 0 : index
    %c0_4 = arith.constant 0 : index
    %c0_5 = arith.constant 0 : index
    %2 = vector.load %arg2[%c0_3, %c0_4, %c0_5] : memref<3x128x128xbf16, #tpu.memory_space<vmem>>, vector<1x128x128xbf16>
    %3 = vector.shape_cast %2 : vector<1x128x128xbf16> to vector<128x128xbf16>
    %cst = arith.constant dense<0.000000e+00> : vector<256x128xf32>
    %4 = tpu.matmul %1, %3, %cst {dimension_numbers = #tpu.dot_dimension_numbers<[1], [0], [0], [1], [0, 0, 1, 1], [], []>} : vector<256x128xbf16>, vector<128x128xbf16>, vector<256x128xf32> -> vector<256x128xf32>
    %5 = arith.truncf %4 : vector<256x128xf32> to vector<256x128xbf16>
    %cst_6 = arith.constant dense<0.000000e+00> : vector<256x128xf32>
    %6 = tpu.matmul %0, %5, %cst_6 {dimension_numbers = #tpu.dot_dimension_numbers<[1], [0], [0], [1], [0, 0, 1, 1], [], []>} : vector<256x256xbf16>, vector<256x128xbf16>, vector<256x128xf32> -> vector<256x128xf32>
    %c0_7 = arith.constant 0 : index
    %c0_8 = arith.constant 0 : index
    %c0_9 = arith.constant 0 : index
    %7 = vector.load %arg3[%c0_7, %c0_8, %c0_9] : memref<3x1x128xf32, #tpu.memory_space<vmem>>, vector<1x1x128xf32>
    %8 = vector.shape_cast %7 : vector<1x1x128xf32> to vector<1x128xf32>
    %9 = vector.broadcast %8 : vector<1x128xf32> to vector<256x128xf32>
    %10 = arith.addf %6, %9 : vector<256x128xf32>
    %c0_10 = arith.constant 0 : index
    %c0_11 = arith.constant 0 : index
    %c0_12 = arith.constant 0 : index
    %11 = vector.load %arg4[%c0_10, %c0_11, %c0_12] : memref<2x1x128xf32, #tpu.memory_space<vmem>>, vector<1x1x128xf32>
    %12 = vector.shape_cast %11 : vector<1x1x128xf32> to vector<1x128xf32>
    %13 = vector.broadcast %12 : vector<1x128xf32> to vector<256x128xf32>
    %14 = arith.mulf %10, %13 : vector<256x128xf32>
    %c0_13 = arith.constant 0 : index
    %c0_14 = arith.constant 0 : index
    %c0_15 = arith.constant 0 : index
    %15 = vector.load %arg5[%c0_13, %c0_14, %c0_15] : memref<2x1x128xf32, #tpu.memory_space<vmem>>, vector<1x1x128xf32>
    %16 = vector.shape_cast %15 : vector<1x1x128xf32> to vector<1x128xf32>
    %17 = vector.broadcast %16 : vector<1x128xf32> to vector<256x128xf32>
    %18 = arith.addf %14, %17 : vector<256x128xf32>
    %cst_16 = arith.constant 0.000000e+00 : f32
    %19 = vector.broadcast %cst_16 : f32 to vector<256x128xf32>
    %20 = arith.maximumf %18, %19 : vector<256x128xf32>
    %21 = arith.truncf %20 : vector<256x128xf32> to vector<256x128xbf16>
    %c1 = arith.constant 1 : index
    %c0_17 = arith.constant 0 : index
    %c0_18 = arith.constant 0 : index
    %22 = vector.load %arg2[%c1, %c0_17, %c0_18] : memref<3x128x128xbf16, #tpu.memory_space<vmem>>, vector<1x128x128xbf16>
    %23 = vector.shape_cast %22 : vector<1x128x128xbf16> to vector<128x128xbf16>
    %cst_19 = arith.constant dense<0.000000e+00> : vector<256x128xf32>
    %24 = tpu.matmul %21, %23, %cst_19 {dimension_numbers = #tpu.dot_dimension_numbers<[1], [0], [0], [1], [0, 0, 1, 1], [], []>} : vector<256x128xbf16>, vector<128x128xbf16>, vector<256x128xf32> -> vector<256x128xf32>
    %25 = arith.truncf %24 : vector<256x128xf32> to vector<256x128xbf16>
    %cst_20 = arith.constant dense<0.000000e+00> : vector<256x128xf32>
    %26 = tpu.matmul %0, %25, %cst_20 {dimension_numbers = #tpu.dot_dimension_numbers<[1], [0], [0], [1], [0, 0, 1, 1], [], []>} : vector<256x256xbf16>, vector<256x128xbf16>, vector<256x128xf32> -> vector<256x128xf32>
    %c1_21 = arith.constant 1 : index
    %c0_22 = arith.constant 0 : index
    %c0_23 = arith.constant 0 : index
    %27 = vector.load %arg3[%c1_21, %c0_22, %c0_23] : memref<3x1x128xf32, #tpu.memory_space<vmem>>, vector<1x1x128xf32>
    %28 = vector.shape_cast %27 : vector<1x1x128xf32> to vector<1x128xf32>
    %29 = vector.broadcast %28 : vector<1x128xf32> to vector<256x128xf32>
    %30 = arith.addf %26, %29 : vector<256x128xf32>
    %c1_24 = arith.constant 1 : index
    %c0_25 = arith.constant 0 : index
    %c0_26 = arith.constant 0 : index
    %31 = vector.load %arg4[%c1_24, %c0_25, %c0_26] : memref<2x1x128xf32, #tpu.memory_space<vmem>>, vector<1x1x128xf32>
    %32 = vector.shape_cast %31 : vector<1x1x128xf32> to vector<1x128xf32>
    %33 = vector.broadcast %32 : vector<1x128xf32> to vector<256x128xf32>
    %34 = arith.mulf %30, %33 : vector<256x128xf32>
    %c1_27 = arith.constant 1 : index
    %c0_28 = arith.constant 0 : index
    %c0_29 = arith.constant 0 : index
    %35 = vector.load %arg5[%c1_27, %c0_28, %c0_29] : memref<2x1x128xf32, #tpu.memory_space<vmem>>, vector<1x1x128xf32>
    %36 = vector.shape_cast %35 : vector<1x1x128xf32> to vector<1x128xf32>
    %37 = vector.broadcast %36 : vector<1x128xf32> to vector<256x128xf32>
    %38 = arith.addf %34, %37 : vector<256x128xf32>
    %cst_30 = arith.constant 0.000000e+00 : f32
    %39 = vector.broadcast %cst_30 : f32 to vector<256x128xf32>
    %40 = arith.maximumf %38, %39 : vector<256x128xf32>
    %41 = arith.truncf %40 : vector<256x128xf32> to vector<256x128xbf16>
    %c2 = arith.constant 2 : index
    %c0_31 = arith.constant 0 : index
    %c0_32 = arith.constant 0 : index
    %42 = vector.load %arg2[%c2, %c0_31, %c0_32] : memref<3x128x128xbf16, #tpu.memory_space<vmem>>, vector<1x128x128xbf16>
    %43 = vector.shape_cast %42 : vector<1x128x128xbf16> to vector<128x128xbf16>
    %cst_33 = arith.constant dense<0.000000e+00> : vector<256x128xf32>
    %44 = tpu.matmul %41, %43, %cst_33 {dimension_numbers = #tpu.dot_dimension_numbers<[1], [0], [0], [1], [0, 0, 1, 1], [], []>} : vector<256x128xbf16>, vector<128x128xbf16>, vector<256x128xf32> -> vector<256x128xf32>
    %45 = arith.truncf %44 : vector<256x128xf32> to vector<256x128xbf16>
    %cst_34 = arith.constant dense<0.000000e+00> : vector<256x128xf32>
    %46 = tpu.matmul %0, %45, %cst_34 {dimension_numbers = #tpu.dot_dimension_numbers<[1], [0], [0], [1], [0, 0, 1, 1], [], []>} : vector<256x256xbf16>, vector<256x128xbf16>, vector<256x128xf32> -> vector<256x128xf32>
    %c2_35 = arith.constant 2 : index
    %c0_36 = arith.constant 0 : index
    %c0_37 = arith.constant 0 : index
    %47 = vector.load %arg3[%c2_35, %c0_36, %c0_37] : memref<3x1x128xf32, #tpu.memory_space<vmem>>, vector<1x1x128xf32>
    %48 = vector.shape_cast %47 : vector<1x1x128xf32> to vector<1x128xf32>
    %49 = vector.broadcast %48 : vector<1x128xf32> to vector<256x128xf32>
    %50 = arith.addf %46, %49 : vector<256x128xf32>
    %51 = arith.truncf %50 : vector<256x128xf32> to vector<256x128xbf16>
    %c0_38 = arith.constant 0 : index
    %c0_39 = arith.constant 0 : index
    %52 = vector.load %arg6[%c0_38, %c0_39] : memref<8x256xbf16, #tpu.memory_space<vmem>>, vector<8x256xbf16>
    %cst_40 = arith.constant dense<0.000000e+00> : vector<8x128xf32>
    %53 = tpu.matmul %52, %51, %cst_40 {dimension_numbers = #tpu.dot_dimension_numbers<[1], [0], [0], [1], [0, 0, 1, 1], [], []>} : vector<8x256xbf16>, vector<256x128xbf16>, vector<8x128xf32> -> vector<8x128xf32>
    %54 = arith.truncf %53 : vector<8x128xf32> to vector<8x128xbf16>
    %c0_41 = arith.constant 0 : index
    %c0_42 = arith.constant 0 : index
    %55 = vector.load %arg7[%c0_41, %c0_42] : memref<128x128xbf16, #tpu.memory_space<vmem>>, vector<128x128xbf16>
    %cst_43 = arith.constant dense<0.000000e+00> : vector<8x128xf32>
    %56 = tpu.matmul %54, %55, %cst_43 {dimension_numbers = #tpu.dot_dimension_numbers<[1], [0], [0], [1], [0, 0, 1, 1], [], []>} : vector<8x128xbf16>, vector<128x128xbf16>, vector<8x128xf32> -> vector<8x128xf32>
    %c0_44 = arith.constant 0 : index
    %c0_45 = arith.constant 0 : index
    %57 = vector.load %arg8[%c0_44, %c0_45] : memref<1x128xf32, #tpu.memory_space<vmem>>, vector<1x128xf32>
    %58 = vector.broadcast %57 : vector<1x128xf32> to vector<8x128xf32>
    %59 = arith.addf %56, %58 : vector<8x128xf32>
    %c0_46 = arith.constant 0 : index
    %c0_47 = arith.constant 0 : index
    %60 = vector.load %arg9[%c0_46, %c0_47] : memref<8x128xf32, #tpu.memory_space<vmem>>, vector<8x128xf32>
    tpu.vector_store %arg9[%c0_46, %c0_47], %59 {strides = array<i32>} : memref<8x128xf32, #tpu.memory_space<vmem>>, vector<8x128xf32>,
    return
  }
}

</mosaic_0001>

<llo_original>
// kernel: tpu_custom_call.1
$region0: #{tpu_custom_call.1}
  #allocation0 [shape = 'u32[]', space=smem, size = 0x4, offset = 0x4, fixed_abs, tag = 'smem constant byte address 0x4 - core index']
  #allocation1 [shape = 'u32[72,128]{1,0:T(1,128)}', space=vmem, size = 0x9000, scoped, tag = 'internal scratch']
  %s0 = inlined_call_operand.hbm [shape: bf16[256,256], index: 0, kind: input, shape index: {}]
  %s1 = inlined_call_operand.hbm [shape: bf16[256,128], index: 1, kind: input, shape index: {}]
  %s2 = inlined_call_operand.hbm [shape: bf16[3,128,128], index: 2, kind: input, shape index: {}]
  %s3 = inlined_call_operand.hbm [shape: f32[3,1,128], index: 3, kind: input, shape index: {}]
  %s4 = inlined_call_operand.vmem [shape: f32[2,1,128], index: 4, kind: input, shape index: {}]
  %s5 = inlined_call_operand.vmem [shape: f32[2,1,128], index: 5, kind: input, shape index: {}]
  %s6 = inlined_call_operand.hbm [shape: bf16[8,256], index: 6, kind: input, shape index: {}]
  %s7 = inlined_call_operand.hbm [shape: bf16[128,128], index: 7, kind: input, shape index: {}]
  %s8 = inlined_call_operand.vmem [shape: f32[1,128], index: 8, kind: input, shape index: {}]
  %s9 = inlined_call_operand.hbm [shape: f32[8,128], index: 9, kind: output, shape index: {}]
  %s10 = sld [smem:[#allocation0]]
  $region70: #{tpu_custom_call.1} parent=0
    _
  %s12 = ssub.s32 1, %s10
  %s13 = scalar_select 0, %s12, %s10
  $region1: #{tpu_custom_call.1} parent=0
    #allocation2 [shape = 'u8[131072]{0}', space=vmem, size = 0x20000, scoped, tag = 'input window, operand 0, single buffered']
    #allocation3 [shape = 's32[1]{0}', space=sflag, size = 0x4, scoped, tag = 'scoped memory for tpu_custom_call.1']
    #allocation4 [shape = 's32[1]{0}', space=sflag, size = 0x4, scoped, tag = 'scoped memory for tpu_custom_call.1']
    #allocation5 [shape = 'u8[65536]{0}', space=vmem, size = 0x10000, scoped, tag = 'input window, operand 1, single buffered']
    #allocation6 [shape = 's32[1]{0}', space=sflag, size = 0x4, scoped, tag = 'scoped memory for tpu_custom_call.1']
    #allocation7 [shape = 'u8[98304]{0}', space=vmem, size = 0x18000, scoped, tag = 'input window, operand 2, single buffered']
    #allocation8 [shape = 'u8[1536]{0}', space=vmem, size = 0x800, scoped, tag = 'input window, operand 3, single buffered']
    #allocation9 [shape = 's32[1]{0}', space=sflag, size = 0x4, scoped, tag = 'scoped memory for tpu_custom_call.1']
    #allocation10 [shape = 'u8[4096]{0}', space=vmem, size = 0x1000, scoped, tag = 'input window, operand 6, single buffered']
    #allocation11 [shape = 'u8[32768]{0}', space=vmem, size = 0x8000, scoped, tag = 'input window, operand 7, single buffered']
    #allocation12 [shape = 's32[1]{0}', space=sflag, size = 0x4, scoped, tag = 'scoped memory for tpu_custom_call.1']
    #allocation13 [shape = 'u8[4096]{0}', space=vmem, size = 0x1000, scoped, tag = 'output window, operand 0, single buffered']
    %14 = vsyncpa [#allocation3], 0
    %15 = vsyncpa [#allocation6], 0
    %16 = vsyncpa [#allocation9], 0
    %17 = vsyncpa [#allocation12], 0
    %18 = vsyncpa [#allocation4], 0
    // Predicated region
    $region2: #{tpu_custom_call.1} parent=1 // pred_check
      _
    $region3: #{tpu_custom_call.1} parent=1 // pred_check_branch
      %20 = sbr.rel (0) target = $region5
    $region4: #{tpu_custom_call.1} parent=1 // pred_region
      %22 = vsyncadd [#allocation3], 0
      %s23 = sshll.u32 %s0, 4
      %s24 = int_to_ptr.hbm [resolvable:$true] %s23
      %s25 = sshll.u32 [#allocation2], 4
      %s26 = int_to_ptr.vmem [resolvable:$true] %s25
      %31 = dma.hbm_to_vmem [thread:$0]  %s24, 4096, %s26, [#allocation3], 128, 128, 8
    $region5: #{tpu_custom_call.1} parent=1 // pred_fallthru
      _
    // Predicated region
    $region6: #{tpu_custom_call.1} parent=1 // pred_check
      _
    $region7: #{tpu_custom_call.1} parent=1 // pred_check_branch
      %33 = sbr.rel (0) target = $region9
    $region8: #{tpu_custom_call.1} parent=1 // pred_region
      %35 = vsyncadd [#allocation6], 0
      %s36 = sshll.u32 %s1, 4
      %s37 = int_to_ptr.hbm [resolvable:$true] %s36
      %s38 = sshll.u32 [#allocation5], 4
      %s39 = int_to_ptr.vmem [resolvable:$true] %s38
      %44 = dma.hbm_to_vmem [thread:$0]  %s37, 2048, %s39, [#allocation6], 64, 64, 4
    $region9: #{tpu_custom_call.1} parent=1 // pred_fallthru
      _
    // Predicated region
    $region10: #{tpu_custom_call.1} parent=1 // pred_check
      _
    $region11: #{tpu_custom_call.1} parent=1 // pred_check_branch
      %46 = sbr.rel (0) target = $region13
    $region12: #{tpu_custom_call.1} parent=1 // pred_region
      %48 = vsyncadd [#allocation6], 0
      %s49 = sshll.u32 %s2, 4
      %s50 = int_to_ptr.hbm [resolvable:$true] %s49
      %s51 = sshll.u32 [#allocation7], 4
      %s52 = int_to_ptr.vmem [resolvable:$true] %s51
      %57 = dma.hbm_to_vmem [thread:$0]  %s50, 3072, %s52, [#allocation6], 64, 64, 4
    $region13: #{tpu_custom_call.1} parent=1 // pred_fallthru
      _
    // Predicated region
    $region14: #{tpu_custom_call.1} parent=1 // pred_check
      _
    $region15: #{tpu_custom_call.1} parent=1 // pred_check_branch
      %59 = sbr.rel (0) target = $region17
    $region16: #{tpu_custom_call.1} parent=1 // pred_region
      %61 = vsyncadd [#allocation9], 0
      %s62 = sshll.u32 %s3, 4
      %s63 = int_to_ptr.hbm [resolvable:$true] %s62
      %s64 = sshll.u32 [#allocation8], 4
      %s65 = int_to_ptr.vmem [resolvable:$true] %s64
      %70 = dma.hbm_to_vmem [thread:$0]  %s63, 48, %s65, [#allocation9], 16, 16, 1
    $region17: #{tpu_custom_call.1} parent=1 // pred_fallthru
      _
    // Predicated region
    $region18: #{tpu_custom_call.1} parent=1 // pred_check
      _
    $region19: #{tpu_custom_call.1} parent=1 // pred_check_branch
      %72 = sbr.rel (0) target = $region21
    $region20: #{tpu_custom_call.1} parent=1 // pred_region
      _
    $region21: #{tpu_custom_call.1} parent=1 // pred_fallthru
      _
    // Predicated region
    $region22: #{tpu_custom_call.1} parent=1 // pred_check
      _
    $region23: #{tpu_custom_call.1} parent=1 // pred_check_branch
      %74 = sbr.rel (0) target = $region25
    $region24: #{tpu_custom_call.1} parent=1 // pred_region
      _
    $region25: #{tpu_custom_call.1} parent=1 // pred_fallthru
      _
    // Predicated region
    $region26: #{tpu_custom_call.1} parent=1 // pred_check
      _
    $region27: #{tpu_custom_call.1} parent=1 // pred_check_branch
      %76 = sbr.rel (0) target = $region29
    $region28: #{tpu_custom_call.1} parent=1 // pred_region
      %78 = vsyncadd [#allocation9], 0
      %s80 = sshll.u32 %s6, 4
      %s81 = int_to_ptr.hbm [resolvable:$true] %s80
      %s82 = sshll.u32 [#allocation10], 4
      %s83 = int_to_ptr.vmem [resolvable:$true] %s82
      %85 = dma.hbm_to_vmem [thread:$0]  %s81, 128, %s83, [#allocation9]
    $region29: #{tpu_custom_call.1} parent=1 // pred_fallthru
      _
    // Predicated region
    $region30: #{tpu_custom_call.1} parent=1 // pred_check
      _
    $region31: #{tpu_custom_call.1} parent=1 // pred_check_branch
      %87 = sbr.rel (0) target = $region33
    $region32: #{tpu_custom_call.1} parent=1 // pred_region
      %89 = vsyncadd [#allocation12], 0
      %s90 = sshll.u32 %s7, 4
      %s91 = int_to_ptr.hbm [resolvable:$true] %s90
      %s92 = sshll.u32 [#allocation11], 4
      %s93 = int_to_ptr.vmem [resolvable:$true] %s92
      %98 = dma.hbm_to_vmem [thread:$0]  %s91, 1024, %s93, [#allocation12], 64, 64, 4
    $region33: #{tpu_custom_call.1} parent=1 // pred_fallthru
      _
    // Predicated region
    $region34: #{tpu_custom_call.1} parent=1 // pred_check
      _
    $region35: #{tpu_custom_call.1} parent=1 // pred_check_branch
      %100 = sbr.rel (0) target = $region37
    $region36: #{tpu_custom_call.1} parent=1 // pred_region
      _
    $region37: #{tpu_custom_call.1} parent=1 // pred_fallthru
      _
    // Predicated region
    $region38: #{tpu_custom_call.1} parent=1 // pred_check
      _
    $region39: #{tpu_custom_call.1} parent=1 // pred_check_branch
      %102 = sbr.rel (0) target = $region41
    $region40: #{tpu_custom_call.1} parent=1 // pred_region
      %104 = dma.done [#allocation3], 4096
    $region41: #{tpu_custom_call.1} parent=1 // pred_fallthru
      _
    // Predicated region
    $region42: #{tpu_custom_call.1} parent=1 // pred_check
      _
    $region43: #{tpu_custom_call.1} parent=1 // pred_check_branch
      %106 = sbr.rel (0) target = $region45
    $region44: #{tpu_custom_call.1} parent=1 // pred_region
      %108 = dma.done [#allocation6], 2048
    $region45: #{tpu_custom_call.1} parent=1 // pred_fallthru
      _
    // Predicated region
    $region46: #{tpu_custom_call.1} parent=1 // pred_check
      _
    $region47: #{tpu_custom_call.1} parent=1 // pred_check_branch
      %110 = sbr.rel (0) target = $region49
    $region48: #{tpu_custom_call.1} parent=1 // pred_region
      %112 = dma.done [#allocation6], 3072
    $region49: #{tpu_custom_call.1} parent=1 // pred_fallthru
      _
    // Predicated region
    $region50: #{tpu_custom_call.1} parent=1 // pred_check
      _
    $region51: #{tpu_custom_call.1} parent=1 // pred_check_branch
      %114 = sbr.rel (0) target = $region53
    $region52: #{tpu_custom_call.1} parent=1 // pred_region
      %116 = dma.done [#allocation9], 48
    $region53: #{tpu_custom_call.1} parent=1 // pred_fallthru
      _
    // Predicated region
    $region54: #{tpu_custom_call.1} parent=1 // pred_check
      _
    $region55: #{tpu_custom_call.1} parent=1 // pred_check_branch
      %118 = sbr.rel (0) target = $region57
    $region56: #{tpu_custom_call.1} parent=1 // pred_region
      %120 = dma.done [#allocation9], 128
    $region57: #{tpu_custom_call.1} parent=1 // pred_fallthru
      _
    // Predicated region
    $region58: #{tpu_custom_call.1} parent=1 // pred_check
      _
    $region59: #{tpu_custom_call.1} parent=1 // pred_check_branch
      %122 = sbr.rel (0) target = $region61
    $region60: #{tpu_custom_call.1} parent=1 // pred_region
      %124 = dma.done [#allocation12], 1024
    $region61: #{tpu_custom_call.1} parent=1 // pred_fallthru
      _
    %v125 = vld [vmem:[#allocation2] sm:$0xff]
    %v126 = vld [vmem:[#allocation2 + $0x8] sm:$0xff]
    %v127 = vld [vmem:[#allocation2 + $0x10] sm:$0xff]
    %v128 = vld [vmem:[#allocation2 + $0x18] sm:$0xff]
    %v129 = vld [vmem:[#allocation2 + $0x20] sm:$0xff]
    %v130 = vld [vmem:[#allocation2 + $0x28] sm:$0xff]
    %v131 = vld [vmem:[#allocation2 + $0x30] sm:$0xff]
    %v132 = vld [vmem:[#allocation2 + $0x38] sm:$0xff]
    %v133 = vld [vmem:[#allocation2 + $0x40] sm:$0xff]
    %v134 = vld [vmem:[#allocation2 + $0x48] sm:$0xff]
    %v135 = vld [vmem:[#allocation2 + $0x50] sm:$0xff]
    %v136 = vld [vmem:[#allocation2 + $0x58] sm:$0xff]
    %v137 = vld [vmem:[#allocation2 + $0x60] sm:$0xff]
    %v138 = vld [vmem:[#allocation2 + $0x68] sm:$0xff]
    %v139 = vld [vmem:[#allocation2 + $0x70] sm:$0xff]
    %v140 = vld [vmem:[#allocation2 + $0x78] sm:$0xff]
    %v141 = vld [vmem:[#allocation2 + $0x80] sm:$0xff]
    %v142 = vld [vmem:[#allocation2 + $0x88] sm:$0xff]
    %v143 = vld [vmem:[#allocation2 + $0x90] sm:$0xff]
    %v144 = vld [vmem:[#allocation2 + $0x98] sm:$0xff]
    %v145 = vld [vmem:[#allocation2 + $0xa0] sm:$0xff]
    %v146 = vld [vmem:[#allocation2 + $0xa8] sm:$0xff]
    %v147 = vld [vmem:[#allocation2 + $0xb0] sm:$0xff]
    %v148 = vld [vmem:[#allocation2 + $0xb8] sm:$0xff]
    %v149 = vld [vmem:[#allocation2 + $0xc0] sm:$0xff]
    %v150 = vld [vmem:[#allocation2 + $0xc8] sm:$0xff]
    %v151 = vld [vmem:[#allocation2 + $0xd0] sm:$0xff]
    %v152 = vld [vmem:[#allocation2 + $0xd8] sm:$0xff]
    %v153 = vld [vmem:[#allocation2 + $0xe0] sm:$0xff]
    %v154 = vld [vmem:[#allocation2 + $0xe8] sm:$0xff]
    %v155 = vld [vmem:[#allocation2 + $0xf0] sm:$0xff]
    %v156 = vld [vmem:[#allocation2 + $0xf8] sm:$0xff]
    %v157 = vld [vmem:[#allocation5] sm:$0xf]
    %v158 = vld [vmem:[#allocation5 + $0x4] sm:$0xf]
    %v159 = vld [vmem:[#allocation5 + $0x8] sm:$0xf]
    %v160 = vld [vmem:[#allocation5 + $0xc] sm:$0xf]
    %v161 = vld [vmem:[#allocation5 + $0x10] sm:$0xf]
    %v162 = vld [vmem:[#allocation5 + $0x14] sm:$0xf]
    %v163 = vld [vmem:[#allocation5 + $0x18] sm:$0xf]
    %v164 = vld [vmem:[#allocation5 + $0x1c] sm:$0xf]
    %v165 = vld [vmem:[#allocation5 + $0x20] sm:$0xf]
    %v166 = vld [vmem:[#allocation5 + $0x24] sm:$0xf]
    %v167 = vld [vmem:[#allocation5 + $0x28] sm:$0xf]
    %v168 = vld [vmem:[#allocation5 + $0x2c] sm:$0xf]
    %v169 = vld [vmem:[#allocation5 + $0x30] sm:$0xf]
    %v170 = vld [vmem:[#allocation5 + $0x34] sm:$0xf]
    %v171 = vld [vmem:[#allocation5 + $0x38] sm:$0xf]
    %v172 = vld [vmem:[#allocation5 + $0x3c] sm:$0xf]
    %v173 = vld [vmem:[#allocation5 + $0x40] sm:$0xf]
    %v174 = vld [vmem:[#allocation5 + $0x44] sm:$0xf]
    %v175 = vld [vmem:[#allocation5 + $0x48] sm:$0xf]
    %v176 = vld [vmem:[#allocation5 + $0x4c] sm:$0xf]
    %v177 = vld [vmem:[#allocation5 + $0x50] sm:$0xf]
    %v178 = vld [vmem:[#allocation5 + $0x54] sm:$0xf]
    %v179 = vld [vmem:[#allocation5 + $0x58] sm:$0xf]
    %v180 = vld [vmem:[#allocation5 + $0x5c] sm:$0xf]
    %v181 = vld [vmem:[#allocation5 + $0x60] sm:$0xf]
    %v182 = vld [vmem:[#allocation5 + $0x64] sm:$0xf]
    %v183 = vld [vmem:[#allocation5 + $0x68] sm:$0xf]
    %v184 = vld [vmem:[#allocation5 + $0x6c] sm:$0xf]
    %v185 = vld [vmem:[#allocation5 + $0x70] sm:$0xf]
    %v186 = vld [vmem:[#allocation5 + $0x74] sm:$0xf]
    %v187 = vld [vmem:[#allocation5 + $0x78] sm:$0xf]
    %v188 = vld [vmem:[#allocation5 + $0x7c] sm:$0xf]
    %v189 = vld [vmem:[#allocation7] sm:$0xf]
    %v190 = vld [vmem:[#allocation7 + $0x4] sm:$0xf]
    %v191 = vld [vmem:[#allocation7 + $0x8] sm:$0xf]
    %v192 = vld [vmem:[#allocation7 + $0xc] sm:$0xf]
    %v193 = vld [vmem:[#allocation7 + $0x10] sm:$0xf]
    %v194 = vld [vmem:[#allocation7 + $0x14] sm:$0xf]
    %v195 = vld [vmem:[#allocation7 + $0x18] sm:$0xf]
    %v196 = vld [vmem:[#allocation7 + $0x1c] sm:$0xf]
    %v197 = vld [vmem:[#allocation7 + $0x20] sm:$0xf]
    %v198 = vld [vmem:[#allocation7 + $0x24] sm:$0xf]
    %v199 = vld [vmem:[#allocation7 + $0x28] sm:$0xf]
    %v200 = vld [vmem:[#allocation7 + $0x2c] sm:$0xf]
    %v201 = vld [vmem:[#allocation7 + $0x30] sm:$0xf]
    %v202 = vld [vmem:[#allocation7 + $0x34] sm:$0xf]
    %v203 = vld [vmem:[#allocation7 + $0x38] sm:$0xf]
    %v204 = vld [vmem:[#allocation7 + $0x3c] sm:$0xf]
    %v237 = vunpack.c.l.b16 %v157
    %v238 = vunpack.c.l.b16 %v158
    %v239 = vunpack.c.l.b16 %v159
    %v240 = vunpack.c.l.b16 %v160
    %v241 = vunpack.c.l.b16 %v161
    %v242 = vunpack.c.l.b16 %v162
    %v243 = vunpack.c.l.b16 %v163
    %v244 = vunpack.c.l.b16 %v164
    %v245 = vunpack.c.l.b16 %v165
    %v246 = vunpack.c.l.b16 %v166
    %v247 = vunpack.c.l.b16 %v167
    %v248 = vunpack.c.l.b16 %v168
    %v249 = vunpack.c.l.b16 %v169
    %v250 = vunpack.c.l.b16 %v170
    %v251 = vunpack.c.l.b16 %v171
    %v252 = vunpack.c.l.b16 %v172
    %v253 = vunpack.c.l.b16 %v173
    %v254 = vunpack.c.l.b16 %v174
    %v255 = vunpack.c.l.b16 %v175
    %v256 = vunpack.c.l.b16 %v176
    %v257 = vunpack.c.l.b16 %v177
    %v258 = vunpack.c.l.b16 %v178
    %v259 = vunpack.c.l.b16 %v179
    %v260 = vunpack.c.l.b16 %v180
    %v261 = vunpack.c.l.b16 %v181
    %v262 = vunpack.c.l.b16 %v182
    %v263 = vunpack.c.l.b16 %v183
    %v264 = vunpack.c.l.b16 %v184
    %v265 = vunpack.c.l.b16 %v185
    %v266 = vunpack.c.l.b16 %v186
    %v267 = vunpack.c.l.b16 %v187
    %v268 = vunpack.c.l.b16 %v188
    %v269 = vpack.c.b16 %v238, %v237
    %v270 = vpack.c.b16 %v240, %v239
    %v271 = vpack.c.b16 %v242, %v241
    %v272 = vpack.c.b16 %v244, %v243
    %v273 = vpack.c.b16 %v246, %v245
    %v274 = vpack.c.b16 %v248, %v247
    %v275 = vpack.c.b16 %v250, %v249
    %v276 = vpack.c.b16 %v252, %v251
    %v277 = vpack.c.b16 %v254, %v253
    %v278 = vpack.c.b16 %v256, %v255
    %v279 = vpack.c.b16 %v258, %v257
    %v280 = vpack.c.b16 %v260, %v259
    %v281 = vpack.c.b16 %v262, %v261
    %v282 = vpack.c.b16 %v264, %v263
    %v283 = vpack.c.b16 %v266, %v265
    %v284 = vpack.c.b16 %v268, %v267
    %v317 = vunpack.c.l.b16 %v189
    %v318 = vunpack.c.l.b16 %v190
    %v319 = vunpack.c.l.b16 %v191
    %v320 = vunpack.c.l.b16 %v192
    %v321 = vunpack.c.l.b16 %v193
    %v322 = vunpack.c.l.b16 %v194
    %v323 = vunpack.c.l.b16 %v195
    %v324 = vunpack.c.l.b16 %v196
    %v325 = vunpack.c.l.b16 %v197
    %v326 = vunpack.c.l.b16 %v198
    %v327 = vunpack.c.l.b16 %v199
    %v328 = vunpack.c.l.b16 %v200
    %v329 = vunpack.c.l.b16 %v201
    %v330 = vunpack.c.l.b16 %v202
    %v331 = vunpack.c.l.b16 %v203
    %v332 = vunpack.c.l.b16 %v204
    %v333 = vpack.c.b16 %v318, %v317
    %v334 = vpack.c.b16 %v320, %v319
    %v335 = vpack.c.b16 %v322, %v321
    %v336 = vpack.c.b16 %v324, %v323
    %v337 = vpack.c.b16 %v326, %v325
    %v338 = vpack.c.b16 %v328, %v327
    %v339 = vpack.c.b16 %v330, %v329
    %v340 = vpack.c.b16 %v332, %v331
    %349 = vmatpush.bf16.msra.mxu0 %v340
    %350 = vmatpush.bf16.msra.mxu0 %v339
    %351 = vmatpush.bf16.msra.mxu0 %v338
    %352 = vmatpush.bf16.msra.mxu0 %v337
    %353 = vmatpush.bf16.msra.mxu0 %v336
    %354 = vmatpush.bf16.msra.mxu0 %v335
    %355 = vmatpush.bf16.msra.mxu0 %v334
    %356 = vmatpush.bf16.msra.mxu0 %v333
    %357 = vmatmul.bf16.gmra.mxu0 %v269
    %v358 = vpop.f32.mrf.mxu0
    %v359 = vadd.f32 0.0, %v358
    %v360 = vpop.f32.mrf.mxu0
    %v361 = vadd.f32 0.0, %v360
    %362 = vmatmul.bf16.gmra.mxu0 %v270
    %v363 = vpop.f32.mrf.mxu0
    %v364 = vadd.f32 0.0, %v363
    %v365 = vpop.f32.mrf.mxu0
    %v366 = vadd.f32 0.0, %v365
    %367 = vmatmul.bf16.gmra.mxu0 %v271
    %v368 = vpop.f32.mrf.mxu0
    %v369 = vadd.f32 0.0, %v368
    %v370 = vpop.f32.mrf.mxu0
    %v371 = vadd.f32 0.0, %v370
    %372 = vmatmul.bf16.gmra.mxu0 %v272
    %v373 = vpop.f32.mrf.mxu0
    %v374 = vadd.f32 0.0, %v373
    %v375 = vpop.f32.mrf.mxu0
    %v376 = vadd.f32 0.0, %v375
    %377 = vmatmul.bf16.gmra.mxu0 %v273
    %v378 = vpop.f32.mrf.mxu0
    %v379 = vadd.f32 0.0, %v378
    %v380 = vpop.f32.mrf.mxu0
    %v381 = vadd.f32 0.0, %v380
    %382 = vmatmul.bf16.gmra.mxu0 %v274
    %v383 = vpop.f32.mrf.mxu0
    %v384 = vadd.f32 0.0, %v383
    %v385 = vpop.f32.mrf.mxu0
    %v386 = vadd.f32 0.0, %v385
    %387 = vmatmul.bf16.gmra.mxu0 %v275
    %v388 = vpop.f32.mrf.mxu0
    %v389 = vadd.f32 0.0, %v388
    %v390 = vpop.f32.mrf.mxu0
    %v391 = vadd.f32 0.0, %v390
    %392 = vmatmul.bf16.gmra.mxu0 %v276
    %v393 = vpop.f32.mrf.mxu0
    %v394 = vadd.f32 0.0, %v393
    %v395 = vpop.f32.mrf.mxu0
    %v396 = vadd.f32 0.0, %v395
    %397 = vmatmul.bf16.gmra.mxu0 %v277
    %v398 = vpop.f32.mrf.mxu0
    %v399 = vadd.f32 0.0, %v398
    %v400 = vpop.f32.mrf.mxu0
    %v401 = vadd.f32 0.0, %v400
    %402 = vmatmul.bf16.gmra.mxu0 %v278
    %v403 = vpop.f32.mrf.mxu0
    %v404 = vadd.f32 0.0, %v403
    %v405 = vpop.f32.mrf.mxu0
    %v406 = vadd.f32 0.0, %v405
    %407 = vmatmul.bf16.gmra.mxu0 %v279
    %v408 = vpop.f32.mrf.mxu0
    %v409 = vadd.f32 0.0, %v408
    %v410 = vpop.f32.mrf.mxu0
    %v411 = vadd.f32 0.0, %v410
    %412 = vmatmul.bf16.gmra.mxu0 %v280
    %v413 = vpop.f32.mrf.mxu0
    %v414 = vadd.f32 0.0, %v413
    %v415 = vpop.f32.mrf.mxu0
    %v416 = vadd.f32 0.0, %v415
    %417 = vmatmul.bf16.gmra.mxu0 %v281
    %v418 = vpop.f32.mrf.mxu0
    %v419 = vadd.f32 0.0, %v418
    %v420 = vpop.f32.mrf.mxu0
    %v421 = vadd.f32 0.0, %v420
    %422 = vmatmul.bf16.gmra.mxu0 %v282
    %v423 = vpop.f32.mrf.mxu0
    %v424 = vadd.f32 0.0, %v423
    %v425 = vpop.f32.mrf.mxu0
    %v426 = vadd.f32 0.0, %v425
    %427 = vmatmul.bf16.gmra.mxu0 %v283
    %v428 = vpop.f32.mrf.mxu0
    %v429 = vadd.f32 0.0, %v428
    %v430 = vpop.f32.mrf.mxu0
    %v431 = vadd.f32 0.0, %v430
    %432 = vmatmul.bf16.gmra.mxu0 %v284
    %v433 = vpop.f32.mrf.mxu0
    %v434 = vadd.f32 0.0, %v433
    %v435 = vpop.f32.mrf.mxu0
    %v436 = vadd.f32 0.0, %v435
    %437 = vdwg.mxu0
    %v438 = vpack.c.bf16 %v361, %v359
    %v439 = vpack.c.bf16 %v366, %v364
    %v440 = vpack.c.bf16 %v371, %v369
    %v441 = vpack.c.bf16 %v376, %v374
    %v442 = vpack.c.bf16 %v381, %v379
    %v443 = vpack.c.bf16 %v386, %v384
    %v444 = vpack.c.bf16 %v391, %v389
    %v445 = vpack.c.bf16 %v396, %v394
    %v446 = vpack.c.bf16 %v401, %v399
    %v447 = vpack.c.bf16 %v406, %v404
    %v448 = vpack.c.bf16 %v411, %v409
    %v449 = vpack.c.bf16 %v416, %v414
    %v450 = vpack.c.bf16 %v421, %v419
    %v451 = vpack.c.bf16 %v426, %v424
    %v452 = vpack.c.bf16 %v431, %v429
    %v453 = vpack.c.bf16 %v436, %v434
    %v454 = vld [vmem:[#allocation8] sm:$0x1]
    %v456 = vperm.slane %v454, 0
    %v490 = vunpack.c.l.b16 %v125
    %v491 = vunpack.c.h.b16 %v125
    %v492 = vunpack.c.l.b16 %v126
    %v493 = vunpack.c.h.b16 %v126
    %v494 = vunpack.c.l.b16 %v127
    %v495 = vunpack.c.h.b16 %v127
    %v496 = vunpack.c.l.b16 %v128
    %v497 = vunpack.c.h.b16 %v128
    %v498 = vunpack.c.l.b16 %v129
    %v499 = vunpack.c.h.b16 %v129
    %v500 = vunpack.c.l.b16 %v130
    %v501 = vunpack.c.h.b16 %v130
    %v502 = vunpack.c.l.b16 %v131
    %v503 = vunpack.c.h.b16 %v131
    %v504 = vunpack.c.l.b16 %v132
    %v505 = vunpack.c.h.b16 %v132
    %v506 = vunpack.c.l.b16 %v133
    %v507 = vunpack.c.h.b16 %v133
    %v508 = vunpack.c.l.b16 %v134
    %v509 = vunpack.c.h.b16 %v134
    %v510 = vunpack.c.l.b16 %v135
    %v511 = vunpack.c.h.b16 %v135
    %v512 = vunpack.c.l.b16 %v136
    %v513 = vunpack.c.h.b16 %v136
    %v514 = vunpack.c.l.b16 %v137
    %v515 = vunpack.c.h.b16 %v137
    %v516 = vunpack.c.l.b16 %v138
    %v517 = vunpack.c.h.b16 %v138
    %v518 = vunpack.c.l.b16 %v139
    %v519 = vunpack.c.h.b16 %v139
    %v520 = vunpack.c.l.b16 %v140
    %v521 = vunpack.c.h.b16 %v140
    %v522 = vunpack.c.l.b16 %v141
    %v523 = vunpack.c.h.b16 %v141
    %v524 = vunpack.c.l.b16 %v142
    %v525 = vunpack.c.h.b16 %v142
    %v526 = vunpack.c.l.b16 %v143
    %v527 = vunpack.c.h.b16 %v143
    %v528 = vunpack.c.l.b16 %v144
    %v529 = vunpack.c.h.b16 %v144
    %v530 = vunpack.c.l.b16 %v145
    %v531 = vunpack.c.h.b16 %v145
    %v532 = vunpack.c.l.b16 %v146
    %v533 = vunpack.c.h.b16 %v146
    %v534 = vunpack.c.l.b16 %v147
    %v535 = vunpack.c.h.b16 %v147
    %v536 = vunpack.c.l.b16 %v148
    %v537 = vunpack.c.h.b16 %v148
    %v538 = vunpack.c.l.b16 %v149
    %v539 = vunpack.c.h.b16 %v149
    %v540 = vunpack.c.l.b16 %v150
    %v541 = vunpack.c.h.b16 %v150
    %v542 = vunpack.c.l.b16 %v151
    %v543 = vunpack.c.h.b16 %v151
    %v544 = vunpack.c.l.b16 %v152
    %v545 = vunpack.c.h.b16 %v152
    %v546 = vunpack.c.l.b16 %v153
    %v547 = vunpack.c.h.b16 %v153
    %v548 = vunpack.c.l.b16 %v154
    %v549 = vunpack.c.h.b16 %v154
    %v550 = vunpack.c.l.b16 %v155
    %v551 = vunpack.c.h.b16 %v155
    %v552 = vunpack.c.l.b16 %v156
    %v553 = vunpack.c.h.b16 %v156
    %v554 = vpack.c.b16 %v492, %v490
    %v555 = vpack.c.b16 %v493, %v491
    %v556 = vpack.c.b16 %v496, %v494
    %v557 = vpack.c.b16 %v497, %v495
    %v558 = vpack.c.b16 %v500, %v498
    %v559 = vpack.c.b16 %v501, %v499
    %v560 = vpack.c.b16 %v504, %v502
    %v561 = vpack.c.b16 %v505, %v503
    %v562 = vpack.c.b16 %v508, %v506
    %v563 = vpack.c.b16 %v509, %v507
    %v564 = vpack.c.b16 %v512, %v510
    %v565 = vpack.c.b16 %v513, %v511
    %v566 = vpack.c.b16 %v516, %v514
    %v567 = vpack.c.b16 %v517, %v515
    %v568 = vpack.c.b16 %v520, %v518
    %v569 = vpack.c.b16 %v521, %v519
    %v570 = vpack.c.b16 %v524, %v522
    %v571 = vpack.c.b16 %v525, %v523
    %v572 = vpack.c.b16 %v528, %v526
    %v573 = vpack.c.b16 %v529, %v527
    %v574 = vpack.c.b16 %v532, %v530
    %v575 = vpack.c.b16 %v533, %v531
    %v576 = vpack.c.b16 %v536, %v534
    %v577 = vpack.c.b16 %v537, %v535
    %v578 = vpack.c.b16 %v540, %v538
    %v579 = vpack.c.b16 %v541, %v539
    %v580 = vpack.c.b16 %v544, %v542
    %v581 = vpack.c.b16 %v545, %v543
    %v582 = vpack.c.b16 %v548, %v546
    %v583 = vpack.c.b16 %v549, %v547
    %v584 = vpack.c.b16 %v552, %v550
    %v585 = vpack.c.b16 %v553, %v551
    %618 = vmatpush.bf16.msra.mxu0 %v445
    %619 = vmatpush.bf16.msra.mxu0 %v444
    %620 = vmatpush.bf16.msra.mxu0 %v443
    %621 = vmatpush.bf16.msra.mxu0 %v442
    %622 = vmatpush.bf16.msra.mxu0 %v441
    %623 = vmatpush.bf16.msra.mxu0 %v440
    %624 = vmatpush.bf16.msra.mxu0 %v439
    %625 = vmatpush.bf16.msra.mxu0 %v438
    %626 = vmatmul.bf16.gmra.mxu0 %v554
    %v627 = vpop.f32.mrf.mxu0
    %v628 = vadd.f32 %v456, %v627
    %v629 = vpop.f32.mrf.mxu0
    %v630 = vadd.f32 %v456, %v629
    %631 = vmatmul.bf16.gmra.mxu0 %v556
    %v632 = vpop.f32.mrf.mxu0
    %v633 = vadd.f32 %v456, %v632
    %v634 = vpop.f32.mrf.mxu0
    %v635 = vadd.f32 %v456, %v634
    %636 = vmatmul.bf16.gmra.mxu0 %v558
    %v637 = vpop.f32.mrf.mxu0
    %v638 = vadd.f32 %v456, %v637
    %v639 = vpop.f32.mrf.mxu0
    %v640 = vadd.f32 %v456, %v639
    %641 = vmatmul.bf16.gmra.mxu0 %v560
    %v642 = vpop.f32.mrf.mxu0
    %v643 = vadd.f32 %v456, %v642
    %v644 = vpop.f32.mrf.mxu0
    %v645 = vadd.f32 %v456, %v644
    %646 = vmatmul.bf16.gmra.mxu0 %v562
    %v647 = vpop.f32.mrf.mxu0
    %v648 = vadd.f32 %v456, %v647
    %v649 = vpop.f32.mrf.mxu0
    %v650 = vadd.f32 %v456, %v649
    %651 = vmatmul.bf16.gmra.mxu0 %v564
    %v652 = vpop.f32.mrf.mxu0
    %v653 = vadd.f32 %v456, %v652
    %v654 = vpop.f32.mrf.mxu0
    %v655 = vadd.f32 %v456, %v654
    %656 = vmatmul.bf16.gmra.mxu0 %v566
    %v657 = vpop.f32.mrf.mxu0
    %v658 = vadd.f32 %v456, %v657
    %v659 = vpop.f32.mrf.mxu0
    %v660 = vadd.f32 %v456, %v659
    %661 = vmatmul.bf16.gmra.mxu0 %v568
    %v662 = vpop.f32.mrf.mxu0
    %v663 = vadd.f32 %v456, %v662
    %v664 = vpop.f32.mrf.mxu0
    %v665 = vadd.f32 %v456, %v664
    %666 = vmatmul.bf16.gmra.mxu0 %v570
    %v667 = vpop.f32.mrf.mxu0
    %v668 = vadd.f32 %v456, %v667
    %v669 = vpop.f32.mrf.mxu0
    %v670 = vadd.f32 %v456, %v669
    %671 = vmatmul.bf16.gmra.mxu0 %v572
    %v672 = vpop.f32.mrf.mxu0
    %v673 = vadd.f32 %v456, %v672
    %v674 = vpop.f32.mrf.mxu0
    %v675 = vadd.f32 %v456, %v674
    %676 = vmatmul.bf16.gmra.mxu0 %v574
    %v677 = vpop.f32.mrf.mxu0
    %v678 = vadd.f32 %v456, %v677
    %v679 = vpop.f32.mrf.mxu0
    %v680 = vadd.f32 %v456, %v679
    %681 = vmatmul.bf16.gmra.mxu0 %v576
    %v682 = vpop.f32.mrf.mxu0
    %v683 = vadd.f32 %v456, %v682
    %v684 = vpop.f32.mrf.mxu0
    %v685 = vadd.f32 %v456, %v684
    %686 = vmatmul.bf16.gmra.mxu0 %v578
    %v687 = vpop.f32.mrf.mxu0
    %v688 = vadd.f32 %v456, %v687
    %v689 = vpop.f32.mrf.mxu0
    %v690 = vadd.f32 %v456, %v689
    %691 = vmatmul.bf16.gmra.mxu0 %v580
    %v692 = vpop.f32.mrf.mxu0
    %v693 = vadd.f32 %v456, %v692
    %v694 = vpop.f32.mrf.mxu0
    %v695 = vadd.f32 %v456, %v694
    %696 = vmatmul.bf16.gmra.mxu0 %v582
    %v697 = vpop.f32.mrf.mxu0
    %v698 = vadd.f32 %v456, %v697
    %v699 = vpop.f32.mrf.mxu0
    %v700 = vadd.f32 %v456, %v699
    %701 = vmatmul.bf16.gmra.mxu0 %v584
    %v702 = vpop.f32.mrf.mxu0
    %v703 = vadd.f32 %v456, %v702
    %v704 = vpop.f32.mrf.mxu0
    %v705 = vadd.f32 %v456, %v704
    %706 = vdwg.mxu0
    %707 = vmatpush.bf16.msra.mxu0 %v453
    %708 = vmatpush.bf16.msra.mxu0 %v452
    %709 = vmatpush.bf16.msra.mxu0 %v451
    %710 = vmatpush.bf16.msra.mxu0 %v450
    %711 = vmatpush.bf16.msra.mxu0 %v449
    %712 = vmatpush.bf16.msra.mxu0 %v448
    %713 = vmatpush.bf16.msra.mxu0 %v447
    %714 = vmatpush.bf16.msra.mxu0 %v446
    %715 = vmatmul.bf16.gmra.mxu0 %v555
    %v716 = vpop.f32.mrf.mxu0
    %v717 = vadd.f32 %v628, %v716
    %v718 = vpop.f32.mrf.mxu0
    %v719 = vadd.f32 %v630, %v718
    %720 = vmatmul.bf16.gmra.mxu0 %v557
    %v721 = vpop.f32.mrf.mxu0
    %v722 = vadd.f32 %v633, %v721
    %v723 = vpop.f32.mrf.mxu0
    %v724 = vadd.f32 %v635, %v723
    %725 = vmatmul.bf16.gmra.mxu0 %v559
    %v726 = vpop.f32.mrf.mxu0
    %v727 = vadd.f32 %v638, %v726
    %v728 = vpop.f32.mrf.mxu0
    %v729 = vadd.f32 %v640, %v728
    %730 = vmatmul.bf16.gmra.mxu0 %v561
    %v731 = vpop.f32.mrf.mxu0
    %v732 = vadd.f32 %v643, %v731
    %v733 = vpop.f32.mrf.mxu0
    %v734 = vadd.f32 %v645, %v733
    %735 = vmatmul.bf16.gmra.mxu0 %v563
    %v736 = vpop.f32.mrf.mxu0
    %v737 = vadd.f32 %v648, %v736
    %v738 = vpop.f32.mrf.mxu0
    %v739 = vadd.f32 %v650, %v738
    %740 = vmatmul.bf16.gmra.mxu0 %v565
    %v741 = vpop.f32.mrf.mxu0
    %v742 = vadd.f32 %v653, %v741
    %v743 = vpop.f32.mrf.mxu0
    %v744 = vadd.f32 %v655, %v743
    %745 = vmatmul.bf16.gmra.mxu0 %v567
    %v746 = vpop.f32.mrf.mxu0
    %v747 = vadd.f32 %v658, %v746
    %v748 = vpop.f32.mrf.mxu0
    %v749 = vadd.f32 %v660, %v748
    %750 = vmatmul.bf16.gmra.mxu0 %v569
    %v751 = vpop.f32.mrf.mxu0
    %v752 = vadd.f32 %v663, %v751
    %v753 = vpop.f32.mrf.mxu0
    %v754 = vadd.f32 %v665, %v753
    %755 = vmatmul.bf16.gmra.mxu0 %v571
    %v756 = vpop.f32.mrf.mxu0
    %v757 = vadd.f32 %v668, %v756
    %v758 = vpop.f32.mrf.mxu0
    %v759 = vadd.f32 %v670, %v758
    %760 = vmatmul.bf16.gmra.mxu0 %v573
    %v761 = vpop.f32.mrf.mxu0
    %v762 = vadd.f32 %v673, %v761
    %v763 = vpop.f32.mrf.mxu0
    %v764 = vadd.f32 %v675, %v763
    %765 = vmatmul.bf16.gmra.mxu0 %v575
    %v766 = vpop.f32.mrf.mxu0
    %v767 = vadd.f32 %v678, %v766
    %v768 = vpop.f32.mrf.mxu0
    %v769 = vadd.f32 %v680, %v768
    %770 = vmatmul.bf16.gmra.mxu0 %v577
    %v771 = vpop.f32.mrf.mxu0
    %v772 = vadd.f32 %v683, %v771
    %v773 = vpop.f32.mrf.mxu0
    %v774 = vadd.f32 %v685, %v773
    %775 = vmatmul.bf16.gmra.mxu0 %v579
    %v776 = vpop.f32.mrf.mxu0
    %v777 = vadd.f32 %v688, %v776
    %v778 = vpop.f32.mrf.mxu0
    %v779 = vadd.f32 %v690, %v778
    %780 = vmatmul.bf16.gmra.mxu0 %v581
    %v781 = vpop.f32.mrf.mxu0
    %v782 = vadd.f32 %v693, %v781
    %v783 = vpop.f32.mrf.mxu0
    %v784 = vadd.f32 %v695, %v783
    %785 = vmatmul.bf16.gmra.mxu0 %v583
    %v786 = vpop.f32.mrf.mxu0
    %v787 = vadd.f32 %v698, %v786
    %v788 = vpop.f32.mrf.mxu0
    %v789 = vadd.f32 %v700, %v788
    %790 = vmatmul.bf16.gmra.mxu0 %v585
    %v791 = vpop.f32.mrf.mxu0
    %v792 = vadd.f32 %v703, %v791
    %v793 = vpop.f32.mrf.mxu0
    %v794 = vadd.f32 %v705, %v793
    %795 = vdwg.mxu0
    %v796 = vld [vmem:[%s4] sm:$0x1]
    %v798 = vperm.slane %v796, 0
    %v800 = vmul.f32 %v717, %v798
    %v801 = vmul.f32 %v719, %v798
    %v802 = vmul.f32 %v722, %v798
    %v803 = vmul.f32 %v724, %v798
    %v804 = vmul.f32 %v727, %v798
    %v805 = vmul.f32 %v729, %v798
    %v806 = vmul.f32 %v732, %v798
    %v807 = vmul.f32 %v734, %v798
    %v808 = vmul.f32 %v737, %v798
    %v809 = vmul.f32 %v739, %v798
    %v810 = vmul.f32 %v742, %v798
    %v811 = vmul.f32 %v744, %v798
    %v812 = vmul.f32 %v747, %v798
    %v813 = vmul.f32 %v749, %v798
    %v814 = vmul.f32 %v752, %v798
    %v815 = vmul.f32 %v754, %v798
    %v816 = vmul.f32 %v757, %v798
    %v817 = vmul.f32 %v759, %v798
    %v818 = vmul.f32 %v762, %v798
    %v819 = vmul.f32 %v764, %v798
    %v820 = vmul.f32 %v767, %v798
    %v821 = vmul.f32 %v769, %v798
    %v822 = vmul.f32 %v772, %v798
    %v823 = vmul.f32 %v774, %v798
    %v824 = vmul.f32 %v777, %v798
    %v825 = vmul.f32 %v779, %v798
    %v826 = vmul.f32 %v782, %v798
    %v827 = vmul.f32 %v784, %v798
    %v828 = vmul.f32 %v787, %v798
    %v829 = vmul.f32 %v789, %v798
    %v830 = vmul.f32 %v792, %v798
    %v831 = vmul.f32 %v794, %v798
    %v832 = vld [vmem:[%s5] sm:$0x1]
    %v834 = vperm.slane %v832, 0
    %v836 = vadd.f32 %v800, %v834
    %v837 = vadd.f32 %v801, %v834
    %v838 = vadd.f32 %v802, %v834
    %v839 = vadd.f32 %v803, %v834
    %v840 = vadd.f32 %v804, %v834
    %v841 = vadd.f32 %v805, %v834
    %v842 = vadd.f32 %v806, %v834
    %v843 = vadd.f32 %v807, %v834
    %v844 = vadd.f32 %v808, %v834
    %v845 = vadd.f32 %v809, %v834
    %v846 = vadd.f32 %v810, %v834
    %v847 = vadd.f32 %v811, %v834
    %v848 = vadd.f32 %v812, %v834
    %v849 = vadd.f32 %v813, %v834
    %v850 = vadd.f32 %v814, %v834
    %v851 = vadd.f32 %v815, %v834
    %v852 = vadd.f32 %v816, %v834
    %v853 = vadd.f32 %v817, %v834
    %v854 = vadd.f32 %v818, %v834
    %v855 = vadd.f32 %v819, %v834
    %v856 = vadd.f32 %v820, %v834
    %v857 = vadd.f32 %v821, %v834
    %v858 = vadd.f32 %v822, %v834
    %v859 = vadd.f32 %v823, %v834
    %v860 = vadd.f32 %v824, %v834
    %v861 = vadd.f32 %v825, %v834
    %v862 = vadd.f32 %v826, %v834
    %v863 = vadd.f32 %v827, %v834
    %v864 = vadd.f32 %v828, %v834
    %v865 = vadd.f32 %v829, %v834
    %v866 = vadd.f32 %v830, %v834
    %v867 = vadd.f32 %v831, %v834
    %v868 = vmax.f32 %v836, 0.0
    %v869 = vmax.f32 %v837, 0.0
    %v870 = vmax.f32 %v838, 0.0
    %v871 = vmax.f32 %v839, 0.0
    %v872 = vmax.f32 %v840, 0.0
    %v873 = vmax.f32 %v841, 0.0
    %v874 = vmax.f32 %v842, 0.0
    %v875 = vmax.f32 %v843, 0.0
    %v876 = vmax.f32 %v844, 0.0
    %v877 = vmax.f32 %v845, 0.0
    %v878 = vmax.f32 %v846, 0.0
    %v879 = vmax.f32 %v847, 0.0
    %v880 = vmax.f32 %v848, 0.0
    %v881 = vmax.f32 %v849, 0.0
    %v882 = vmax.f32 %v850, 0.0
    %v883 = vmax.f32 %v851, 0.0
    %v884 = vmax.f32 %v852, 0.0
    %v885 = vmax.f32 %v853, 0.0
    %v886 = vmax.f32 %v854, 0.0
    %v887 = vmax.f32 %v855, 0.0
    %v888 = vmax.f32 %v856, 0.0
    %v889 = vmax.f32 %v857, 0.0
    %v890 = vmax.f32 %v858, 0.0
    %v891 = vmax.f32 %v859, 0.0
    %v892 = vmax.f32 %v860, 0.0
    %v893 = vmax.f32 %v861, 0.0
    %v894 = vmax.f32 %v862, 0.0
    %v895 = vmax.f32 %v863, 0.0
    %v896 = vmax.f32 %v864, 0.0
    %v897 = vmax.f32 %v865, 0.0
    %v898 = vmax.f32 %v866, 0.0
    %v899 = vmax.f32 %v867, 0.0
    %v900 = vpack.c.bf16 %v869, %v868
    %v901 = vpack.c.bf16 %v871, %v870
    %v902 = vpack.c.bf16 %v873, %v872
    %v903 = vpack.c.bf16 %v875, %v874
    %v904 = vpack.c.bf16 %v877, %v876
    %v905 = vpack.c.bf16 %v879, %v878
    %v906 = vpack.c.bf16 %v881, %v880
    %v907 = vpack.c.bf16 %v883, %v882
    %v908 = vpack.c.bf16 %v885, %v884
    %v909 = vpack.c.bf16 %v887, %v886
    %v910 = vpack.c.bf16 %v889, %v888
    %v911 = vpack.c.bf16 %v891, %v890
    %v912 = vpack.c.bf16 %v893, %v892
    %v913 = vpack.c.bf16 %v895, %v894
    %v914 = vpack.c.bf16 %v897, %v896
    %v915 = vpack.c.bf16 %v899, %v898
    %s916 = scalar_lea.vmem [#allocation7], 64
    %v917 = vld [vmem:[%s916] sm:$0xf]
    %v918 = vld [vmem:[%s916 + $0x4] sm:$0xf]
    %v919 = vld [vmem:[%s916 + $0x8] sm:$0xf]
    %v920 = vld [vmem:[%s916 + $0xc] sm:$0xf]
    %v921 = vld [vmem:[%s916 + $0x10] sm:$0xf]
    %v922 = vld [vmem:[%s916 + $0x14] sm:$0xf]
    %v923 = vld [vmem:[%s916 + $0x18] sm:$0xf]
    %v924 = vld [vmem:[%s916 + $0x1c] sm:$0xf]
    %v925 = vld [vmem:[%s916 + $0x20] sm:$0xf]
    %v926 = vld [vmem:[%s916 + $0x24] sm:$0xf]
    %v927 = vld [vmem:[%s916 + $0x28] sm:$0xf]
    %v928 = vld [vmem:[%s916 + $0x2c] sm:$0xf]
    %v929 = vld [vmem:[%s916 + $0x30] sm:$0xf]
    %v930 = vld [vmem:[%s916 + $0x34] sm:$0xf]
    %v931 = vld [vmem:[%s916 + $0x38] sm:$0xf]
    %v932 = vld [vmem:[%s916 + $0x3c] sm:$0xf]
    %v949 = vunpack.c.l.b16 %v917
    %v950 = vunpack.c.l.b16 %v918
    %v951 = vunpack.c.l.b16 %v919
    %v952 = vunpack.c.l.b16 %v920
    %v953 = vunpack.c.l.b16 %v921
    %v954 = vunpack.c.l.b16 %v922
    %v955 = vunpack.c.l.b16 %v923
    %v956 = vunpack.c.l.b16 %v924
    %v957 = vunpack.c.l.b16 %v925
    %v958 = vunpack.c.l.b16 %v926
    %v959 = vunpack.c.l.b16 %v927
    %v960 = vunpack.c.l.b16 %v928
    %v961 = vunpack.c.l.b16 %v929
    %v962 = vunpack.c.l.b16 %v930
    %v963 = vunpack.c.l.b16 %v931
    %v964 = vunpack.c.l.b16 %v932
    %v965 = vpack.c.b16 %v950, %v949
    %v966 = vpack.c.b16 %v952, %v951
    %v967 = vpack.c.b16 %v954, %v953
    %v968 = vpack.c.b16 %v956, %v955
    %v969 = vpack.c.b16 %v958, %v957
    %v970 = vpack.c.b16 %v960, %v959
    %v971 = vpack.c.b16 %v962, %v961
    %v972 = vpack.c.b16 %v964, %v963
    %981 = vmatpush.bf16.msra.mxu0 %v972
    %982 = vmatpush.bf16.msra.mxu0 %v971
    %983 = vmatpush.bf16.msra.mxu0 %v970
    %984 = vmatpush.bf16.msra.mxu0 %v969
    %985 = vmatpush.bf16.msra.mxu0 %v968
    %986 = vmatpush.bf16.msra.mxu0 %v967
    %987 = vmatpush.bf16.msra.mxu0 %v966
    %988 = vmatpush.bf16.msra.mxu0 %v965
    %989 = vmatmul.bf16.gmra.mxu0 %v900
    %v990 = vpop.f32.mrf.mxu0
    %v991 = vadd.f32 0.0, %v990
    %v992 = vpop.f32.mrf.mxu0
    %v993 = vadd.f32 0.0, %v992
    %994 = vmatmul.bf16.gmra.mxu0 %v901
    %v995 = vpop.f32.mrf.mxu0
    %v996 = vadd.f32 0.0, %v995
    %v997 = vpop.f32.mrf.mxu0
    %v998 = vadd.f32 0.0, %v997
    %999 = vmatmul.bf16.gmra.mxu0 %v902
    %v1000 = vpop.f32.mrf.mxu0
    %v1001 = vadd.f32 0.0, %v1000
    %v1002 = vpop.f32.mrf.mxu0
    %v1003 = vadd.f32 0.0, %v1002
    %1004 = vmatmul.bf16.gmra.mxu0 %v903
    %v1005 = vpop.f32.mrf.mxu0
    %v1006 = vadd.f32 0.0, %v1005
    %v1007 = vpop.f32.mrf.mxu0
    %v1008 = vadd.f32 0.0, %v1007
    %1009 = vmatmul.bf16.gmra.mxu0 %v904
    %v1010 = vpop.f32.mrf.mxu0
    %v1011 = vadd.f32 0.0, %v1010
    %v1012 = vpop.f32.mrf.mxu0
    %v1013 = vadd.f32 0.0, %v1012
    %1014 = vmatmul.bf16.gmra.mxu0 %v905
    %v1015 = vpop.f32.mrf.mxu0
    %v1016 = vadd.f32 0.0, %v1015
    %v1017 = vpop.f32.mrf.mxu0
    %v1018 = vadd.f32 0.0, %v1017
    %1019 = vmatmul.bf16.gmra.mxu0 %v906
    %v1020 = vpop.f32.mrf.mxu0
    %v1021 = vadd.f32 0.0, %v1020
    %v1022 = vpop.f32.mrf.mxu0
    %v1023 = vadd.f32 0.0, %v1022
    %1024 = vmatmul.bf16.gmra.mxu0 %v907
    %v1025 = vpop.f32.mrf.mxu0
    %v1026 = vadd.f32 0.0, %v1025
    %v1027 = vpop.f32.mrf.mxu0
    %v1028 = vadd.f32 0.0, %v1027
    %1029 = vmatmul.bf16.gmra.mxu0 %v908
    %v1030 = vpop.f32.mrf.mxu0
    %v1031 = vadd.f32 0.0, %v1030
    %v1032 = vpop.f32.mrf.mxu0
    %v1033 = vadd.f32 0.0, %v1032
    %1034 = vmatmul.bf16.gmra.mxu0 %v909
    %v1035 = vpop.f32.mrf.mxu0
    %v1036 = vadd.f32 0.0, %v1035
    %v1037 = vpop.f32.mrf.mxu0
    %v1038 = vadd.f32 0.0, %v1037
    %1039 = vmatmul.bf16.gmra.mxu0 %v910
    %v1040 = vpop.f32.mrf.mxu0
    %v1041 = vadd.f32 0.0, %v1040
    %v1042 = vpop.f32.mrf.mxu0
    %v1043 = vadd.f32 0.0, %v1042
    %1044 = vmatmul.bf16.gmra.mxu0 %v911
    %v1045 = vpop.f32.mrf.mxu0
    %v1046 = vadd.f32 0.0, %v1045
    %v1047 = vpop.f32.mrf.mxu0
    %v1048 = vadd.f32 0.0, %v1047
    %1049 = vmatmul.bf16.gmra.mxu0 %v912
    %v1050 = vpop.f32.mrf.mxu0
    %v1051 = vadd.f32 0.0, %v1050
    %v1052 = vpop.f32.mrf.mxu0
    %v1053 = vadd.f32 0.0, %v1052
    %1054 = vmatmul.bf16.gmra.mxu0 %v913
    %v1055 = vpop.f32.mrf.mxu0
    %v1056 = vadd.f32 0.0, %v1055
    %v1057 = vpop.f32.mrf.mxu0
    %v1058 = vadd.f32 0.0, %v1057
    %1059 = vmatmul.bf16.gmra.mxu0 %v914
    %v1060 = vpop.f32.mrf.mxu0
    %v1061 = vadd.f32 0.0, %v1060
    %v1062 = vpop.f32.mrf.mxu0
    %v1063 = vadd.f32 0.0, %v1062
    %1064 = vmatmul.bf16.gmra.mxu0 %v915
    %v1065 = vpop.f32.mrf.mxu0
    %v1066 = vadd.f32 0.0, %v1065
    %v1067 = vpop.f32.mrf.mxu0
    %v1068 = vadd.f32 0.0, %v1067
    %1069 = vdwg.mxu0
    %v1070 = vpack.c.bf16 %v993, %v991
    %v1071 = vpack.c.bf16 %v998, %v996
    %v1072 = vpack.c.bf16 %v1003, %v1001
    %v1073 = vpack.c.bf16 %v1008, %v1006
    %v1074 = vpack.c.bf16 %v1013, %v1011
    %v1075 = vpack.c.bf16 %v1018, %v1016
    %v1076 = vpack.c.bf16 %v1023, %v1021
    %v1077 = vpack.c.bf16 %v1028, %v1026
    %v1078 = vpack.c.bf16 %v1033, %v1031
    %v1079 = vpack.c.bf16 %v1038, %v1036
    %v1080 = vpack.c.bf16 %v1043, %v1041
    %v1081 = vpack.c.bf16 %v1048, %v1046
    %v1082 = vpack.c.bf16 %v1053, %v1051
    %v1083 = vpack.c.bf16 %v1058, %v1056
    %v1084 = vpack.c.bf16 %v1063, %v1061
    %v1085 = vpack.c.bf16 %v1068, %v1066
    %s1086 = scalar_lea.vmem [#allocation8], 1
    %v1087 = vld [vmem:[%s1086] sm:$0x1]
    %v1089 = vperm.slane %v1087, 0
    %1091 = vmatpush.bf16.msra.mxu0 %v1077
    %1092 = vmatpush.bf16.msra.mxu0 %v1076
    %1093 = vmatpush.bf16.msra.mxu0 %v1075
    %1094 = vmatpush.bf16.msra.mxu0 %v1074
    %1095 = vmatpush.bf16.msra.mxu0 %v1073
    %1096 = vmatpush.bf16.msra.mxu0 %v1072
    %1097 = vmatpush.bf16.msra.mxu0 %v1071
    %1098 = vmatpush.bf16.msra.mxu0 %v1070
    %1099 = vmatmul.bf16.gmra.mxu0 %v554
    %v1100 = vpop.f32.mrf.mxu0
    %v1101 = vadd.f32 %v1089, %v1100
    %v1102 = vpop.f32.mrf.mxu0
    %v1103 = vadd.f32 %v1089, %v1102
    %1104 = vmatmul.bf16.gmra.mxu0 %v556
    %v1105 = vpop.f32.mrf.mxu0
    %v1106 = vadd.f32 %v1089, %v1105
    %v1107 = vpop.f32.mrf.mxu0
    %v1108 = vadd.f32 %v1089, %v1107
    %1109 = vmatmul.bf16.gmra.mxu0 %v558
    %v1110 = vpop.f32.mrf.mxu0
    %v1111 = vadd.f32 %v1089, %v1110
    %v1112 = vpop.f32.mrf.mxu0
    %v1113 = vadd.f32 %v1089, %v1112
    %1114 = vmatmul.bf16.gmra.mxu0 %v560
    %v1115 = vpop.f32.mrf.mxu0
    %v1116 = vadd.f32 %v1089, %v1115
    %v1117 = vpop.f32.mrf.mxu0
    %v1118 = vadd.f32 %v1089, %v1117
    %1119 = vmatmul.bf16.gmra.mxu0 %v562
    %v1120 = vpop.f32.mrf.mxu0
    %v1121 = vadd.f32 %v1089, %v1120
    %v1122 = vpop.f32.mrf.mxu0
    %v1123 = vadd.f32 %v1089, %v1122
    %1124 = vmatmul.bf16.gmra.mxu0 %v564
    %v1125 = vpop.f32.mrf.mxu0
    %v1126 = vadd.f32 %v1089, %v1125
    %v1127 = vpop.f32.mrf.mxu0
    %v1128 = vadd.f32 %v1089, %v1127
    %1129 = vmatmul.bf16.gmra.mxu0 %v566
    %v1130 = vpop.f32.mrf.mxu0
    %v1131 = vadd.f32 %v1089, %v1130
    %v1132 = vpop.f32.mrf.mxu0
    %v1133 = vadd.f32 %v1089, %v1132
    %1134 = vmatmul.bf16.gmra.mxu0 %v568
    %v1135 = vpop.f32.mrf.mxu0
    %v1136 = vadd.f32 %v1089, %v1135
    %v1137 = vpop.f32.mrf.mxu0
    %v1138 = vadd.f32 %v1089, %v1137
    %1139 = vmatmul.bf16.gmra.mxu0 %v570
    %v1140 = vpop.f32.mrf.mxu0
    %v1141 = vadd.f32 %v1089, %v1140
    %v1142 = vpop.f32.mrf.mxu0
    %v1143 = vadd.f32 %v1089, %v1142
    %1144 = vmatmul.bf16.gmra.mxu0 %v572
    %v1145 = vpop.f32.mrf.mxu0
    %v1146 = vadd.f32 %v1089, %v1145
    %v1147 = vpop.f32.mrf.mxu0
    %v1148 = vadd.f32 %v1089, %v1147
    %1149 = vmatmul.bf16.gmra.mxu0 %v574
    %v1150 = vpop.f32.mrf.mxu0
    %v1151 = vadd.f32 %v1089, %v1150
    %v1152 = vpop.f32.mrf.mxu0
    %v1153 = vadd.f32 %v1089, %v1152
    %1154 = vmatmul.bf16.gmra.mxu0 %v576
    %v1155 = vpop.f32.mrf.mxu0
    %v1156 = vadd.f32 %v1089, %v1155
    %v1157 = vpop.f32.mrf.mxu0
    %v1158 = vadd.f32 %v1089, %v1157
    %1159 = vmatmul.bf16.gmra.mxu0 %v578
    %v1160 = vpop.f32.mrf.mxu0
    %v1161 = vadd.f32 %v1089, %v1160
    %v1162 = vpop.f32.mrf.mxu0
    %v1163 = vadd.f32 %v1089, %v1162
    %1164 = vmatmul.bf16.gmra.mxu0 %v580
    %v1165 = vpop.f32.mrf.mxu0
    %v1166 = vadd.f32 %v1089, %v1165
    %v1167 = vpop.f32.mrf.mxu0
    %v1168 = vadd.f32 %v1089, %v1167
    %1169 = vmatmul.bf16.gmra.mxu0 %v582
    %v1170 = vpop.f32.mrf.mxu0
    %v1171 = vadd.f32 %v1089, %v1170
    %v1172 = vpop.f32.mrf.mxu0
    %v1173 = vadd.f32 %v1089, %v1172
    %1174 = vmatmul.bf16.gmra.mxu0 %v584
    %v1175 = vpop.f32.mrf.mxu0
    %v1176 = vadd.f32 %v1089, %v1175
    %v1177 = vpop.f32.mrf.mxu0
    %v1178 = vadd.f32 %v1089, %v1177
    %1179 = vdwg.mxu0
    %1180 = vmatpush.bf16.msra.mxu0 %v1085
    %1181 = vmatpush.bf16.msra.mxu0 %v1084
    %1182 = vmatpush.bf16.msra.mxu0 %v1083
    %1183 = vmatpush.bf16.msra.mxu0 %v1082
    %1184 = vmatpush.bf16.msra.mxu0 %v1081
    %1185 = vmatpush.bf16.msra.mxu0 %v1080
    %1186 = vmatpush.bf16.msra.mxu0 %v1079
    %1187 = vmatpush.bf16.msra.mxu0 %v1078
    %1188 = vmatmul.bf16.gmra.mxu0 %v555
    %v1189 = vpop.f32.mrf.mxu0
    %v1190 = vadd.f32 %v1101, %v1189
    %v1191 = vpop.f32.mrf.mxu0
    %v1192 = vadd.f32 %v1103, %v1191
    %1193 = vmatmul.bf16.gmra.mxu0 %v557
    %v1194 = vpop.f32.mrf.mxu0
    %v1195 = vadd.f32 %v1106, %v1194
    %v1196 = vpop.f32.mrf.mxu0
    %v1197 = vadd.f32 %v1108, %v1196
    %1198 = vmatmul.bf16.gmra.mxu0 %v559
    %v1199 = vpop.f32.mrf.mxu0
    %v1200 = vadd.f32 %v1111, %v1199
    %v1201 = vpop.f32.mrf.mxu0
    %v1202 = vadd.f32 %v1113, %v1201
    %1203 = vmatmul.bf16.gmra.mxu0 %v561
    %v1204 = vpop.f32.mrf.mxu0
    %v1205 = vadd.f32 %v1116, %v1204
    %v1206 = vpop.f32.mrf.mxu0
    %v1207 = vadd.f32 %v1118, %v1206
    %1208 = vmatmul.bf16.gmra.mxu0 %v563
    %v1209 = vpop.f32.mrf.mxu0
    %v1210 = vadd.f32 %v1121, %v1209
    %v1211 = vpop.f32.mrf.mxu0
    %v1212 = vadd.f32 %v1123, %v1211
    %1213 = vmatmul.bf16.gmra.mxu0 %v565
    %v1214 = vpop.f32.mrf.mxu0
    %v1215 = vadd.f32 %v1126, %v1214
    %v1216 = vpop.f32.mrf.mxu0
    %v1217 = vadd.f32 %v1128, %v1216
    %1218 = vmatmul.bf16.gmra.mxu0 %v567
    %v1219 = vpop.f32.mrf.mxu0
    %v1220 = vadd.f32 %v1131, %v1219
    %v1221 = vpop.f32.mrf.mxu0
    %v1222 = vadd.f32 %v1133, %v1221
    %1223 = vmatmul.bf16.gmra.mxu0 %v569
    %v1224 = vpop.f32.mrf.mxu0
    %v1225 = vadd.f32 %v1136, %v1224
    %v1226 = vpop.f32.mrf.mxu0
    %v1227 = vadd.f32 %v1138, %v1226
    %1228 = vmatmul.bf16.gmra.mxu0 %v571
    %v1229 = vpop.f32.mrf.mxu0
    %v1230 = vadd.f32 %v1141, %v1229
    %v1231 = vpop.f32.mrf.mxu0
    %v1232 = vadd.f32 %v1143, %v1231
    %1233 = vmatmul.bf16.gmra.mxu0 %v573
    %v1234 = vpop.f32.mrf.mxu0
    %v1235 = vadd.f32 %v1146, %v1234
    %v1236 = vpop.f32.mrf.mxu0
    %v1237 = vadd.f32 %v1148, %v1236
    %1238 = vmatmul.bf16.gmra.mxu0 %v575
    %v1239 = vpop.f32.mrf.mxu0
    %v1240 = vadd.f32 %v1151, %v1239
    %v1241 = vpop.f32.mrf.mxu0
    %v1242 = vadd.f32 %v1153, %v1241
    %1243 = vmatmul.bf16.gmra.mxu0 %v577
    %v1244 = vpop.f32.mrf.mxu0
    %v1245 = vadd.f32 %v1156, %v1244
    %v1246 = vpop.f32.mrf.mxu0
    %v1247 = vadd.f32 %v1158, %v1246
    %1248 = vmatmul.bf16.gmra.mxu0 %v579
    %v1249 = vpop.f32.mrf.mxu0
    %v1250 = vadd.f32 %v1161, %v1249
    %v1251 = vpop.f32.mrf.mxu0
    %v1252 = vadd.f32 %v1163, %v1251
    %1253 = vmatmul.bf16.gmra.mxu0 %v581
    %v1254 = vpop.f32.mrf.mxu0
    %v1255 = vadd.f32 %v1166, %v1254
    %v1256 = vpop.f32.mrf.mxu0
    %v1257 = vadd.f32 %v1168, %v1256
    %1258 = vmatmul.bf16.gmra.mxu0 %v583
    %v1259 = vpop.f32.mrf.mxu0
    %v1260 = vadd.f32 %v1171, %v1259
    %v1261 = vpop.f32.mrf.mxu0
    %v1262 = vadd.f32 %v1173, %v1261
    %1263 = vmatmul.bf16.gmra.mxu0 %v585
    %v1264 = vpop.f32.mrf.mxu0
    %v1265 = vadd.f32 %v1176, %v1264
    %v1266 = vpop.f32.mrf.mxu0
    %v1267 = vadd.f32 %v1178, %v1266
    %1268 = vdwg.mxu0
    %s1269 = scalar_lea.vmem %s4, 1
    %v1270 = vld [vmem:[%s1269] sm:$0x1]
    %v1272 = vperm.slane %v1270, 0
    %v1274 = vmul.f32 %v1190, %v1272
    %v1275 = vmul.f32 %v1192, %v1272
    %v1276 = vmul.f32 %v1195, %v1272
    %v1277 = vmul.f32 %v1197, %v1272
    %v1278 = vmul.f32 %v1200, %v1272
    %v1279 = vmul.f32 %v1202, %v1272
    %v1280 = vmul.f32 %v1205, %v1272
    %v1281 = vmul.f32 %v1207, %v1272
    %v1282 = vmul.f32 %v1210, %v1272
    %v1283 = vmul.f32 %v1212, %v1272
    %v1284 = vmul.f32 %v1215, %v1272
    %v1285 = vmul.f32 %v1217, %v1272
    %v1286 = vmul.f32 %v1220, %v1272
    %v1287 = vmul.f32 %v1222, %v1272
    %v1288 = vmul.f32 %v1225, %v1272
    %v1289 = vmul.f32 %v1227, %v1272
    %v1290 = vmul.f32 %v1230, %v1272
    %v1291 = vmul.f32 %v1232, %v1272
    %v1292 = vmul.f32 %v1235, %v1272
    %v1293 = vmul.f32 %v1237, %v1272
    %v1294 = vmul.f32 %v1240, %v1272
    %v1295 = vmul.f32 %v1242, %v1272
    %v1296 = vmul.f32 %v1245, %v1272
    %v1297 = vmul.f32 %v1247, %v1272
    %v1298 = vmul.f32 %v1250, %v1272
    %v1299 = vmul.f32 %v1252, %v1272
    %v1300 = vmul.f32 %v1255, %v1272
    %v1301 = vmul.f32 %v1257, %v1272
    %v1302 = vmul.f32 %v1260, %v1272
    %v1303 = vmul.f32 %v1262, %v1272
    %v1304 = vmul.f32 %v1265, %v1272
    %v1305 = vmul.f32 %v1267, %v1272
    %s1306 = scalar_lea.vmem %s5, 1
    %v1307 = vld [vmem:[%s1306] sm:$0x1]
    %v1309 = vperm.slane %v1307, 0
    %v1311 = vadd.f32 %v1274, %v1309
    %v1312 = vadd.f32 %v1275, %v1309
    %v1313 = vadd.f32 %v1276, %v1309
    %v1314 = vadd.f32 %v1277, %v1309
    %v1315 = vadd.f32 %v1278, %v1309
    %v1316 = vadd.f32 %v1279, %v1309
    %v1317 = vadd.f32 %v1280, %v1309
    %v1318 = vadd.f32 %v1281, %v1309
    %v1319 = vadd.f32 %v1282, %v1309
    %v1320 = vadd.f32 %v1283, %v1309
    %v1321 = vadd.f32 %v1284, %v1309
    %v1322 = vadd.f32 %v1285, %v1309
    %v1323 = vadd.f32 %v1286, %v1309
    %v1324 = vadd.f32 %v1287, %v1309
    %v1325 = vadd.f32 %v1288, %v1309
    %v1326 = vadd.f32 %v1289, %v1309
    %v1327 = vadd.f32 %v1290, %v1309
    %v1328 = vadd.f32 %v1291, %v1309
    %v1329 = vadd.f32 %v1292, %v1309
    %v1330 = vadd.f32 %v1293, %v1309
    %v1331 = vadd.f32 %v1294, %v1309
    %v1332 = vadd.f32 %v1295, %v1309
    %v1333 = vadd.f32 %v1296, %v1309
    %v1334 = vadd.f32 %v1297, %v1309
    %v1335 = vadd.f32 %v1298, %v1309
    %v1336 = vadd.f32 %v1299, %v1309
    %v1337 = vadd.f32 %v1300, %v1309
    %v1338 = vadd.f32 %v1301, %v1309
    %v1339 = vadd.f32 %v1302, %v1309
    %v1340 = vadd.f32 %v1303, %v1309
    %v1341 = vadd.f32 %v1304, %v1309
    %v1342 = vadd.f32 %v1305, %v1309
    %v1343 = vmax.f32 %v1311, 0.0
    %v1344 = vmax.f32 %v1312, 0.0
    %v1345 = vmax.f32 %v1313, 0.0
    %v1346 = vmax.f32 %v1314, 0.0
    %v1347 = vmax.f32 %v1315, 0.0
    %v1348 = vmax.f32 %v1316, 0.0
    %v1349 = vmax.f32 %v1317, 0.0
    %v1350 = vmax.f32 %v1318, 0.0
    %v1351 = vmax.f32 %v1319, 0.0
    %v1352 = vmax.f32 %v1320, 0.0
    %v1353 = vmax.f32 %v1321, 0.0
    %v1354 = vmax.f32 %v1322, 0.0
    %v1355 = vmax.f32 %v1323, 0.0
    %v1356 = vmax.f32 %v1324, 0.0
    %v1357 = vmax.f32 %v1325, 0.0
    %v1358 = vmax.f32 %v1326, 0.0
    %v1359 = vmax.f32 %v1327, 0.0
    %v1360 = vmax.f32 %v1328, 0.0
    %v1361 = vmax.f32 %v1329, 0.0
    %v1362 = vmax.f32 %v1330, 0.0
    %v1363 = vmax.f32 %v1331, 0.0
    %v1364 = vmax.f32 %v1332, 0.0
    %v1365 = vmax.f32 %v1333, 0.0
    %v1366 = vmax.f32 %v1334, 0.0
    %v1367 = vmax.f32 %v1335, 0.0
    %v1368 = vmax.f32 %v1336, 0.0
    %v1369 = vmax.f32 %v1337, 0.0
    %v1370 = vmax.f32 %v1338, 0.0
    %v1371 = vmax.f32 %v1339, 0.0
    %v1372 = vmax.f32 %v1340, 0.0
    %v1373 = vmax.f32 %v1341, 0.0
    %v1374 = vmax.f32 %v1342, 0.0
    %v1375 = vpack.c.bf16 %v1344, %v1343
    %v1376 = vpack.c.bf16 %v1346, %v1345
    %v1377 = vpack.c.bf16 %v1348, %v1347
    %v1378 = vpack.c.bf16 %v1350, %v1349
    %v1379 = vpack.c.bf16 %v1352, %v1351
    %v1380 = vpack.c.bf16 %v1354, %v1353
    %v1381 = vpack.c.bf16 %v1356, %v1355
    %v1382 = vpack.c.bf16 %v1358, %v1357
    %v1383 = vpack.c.bf16 %v1360, %v1359
    %v1384 = vpack.c.bf16 %v1362, %v1361
    %v1385 = vpack.c.bf16 %v1364, %v1363
    %v1386 = vpack.c.bf16 %v1366, %v1365
    %v1387 = vpack.c.bf16 %v1368, %v1367
    %v1388 = vpack.c.bf16 %v1370, %v1369
    %v1389 = vpack.c.bf16 %v1372, %v1371
    %v1390 = vpack.c.bf16 %v1374, %v1373
    %s1391 = scalar_lea.vmem [#allocation7], 128
    %v1392 = vld [vmem:[%s1391] sm:$0xf]
    %v1393 = vld [vmem:[%s1391 + $0x4] sm:$0xf]
    %v1394 = vld [vmem:[%s1391 + $0x8] sm:$0xf]
    %v1395 = vld [vmem:[%s1391 + $0xc] sm:$0xf]
    %v1396 = vld [vmem:[%s1391 + $0x10] sm:$0xf]
    %v1397 = vld [vmem:[%s1391 + $0x14] sm:$0xf]
    %v1398 = vld [vmem:[%s1391 + $0x18] sm:$0xf]
    %v1399 = vld [vmem:[%s1391 + $0x1c] sm:$0xf]
    %v1400 = vld [vmem:[%s1391 + $0x20] sm:$0xf]
    %v1401 = vld [vmem:[%s1391 + $0x24] sm:$0xf]
    %v1402 = vld [vmem:[%s1391 + $0x28] sm:$0xf]
    %v1403 = vld [vmem:[%s1391 + $0x2c] sm:$0xf]
    %v1404 = vld [vmem:[%s1391 + $0x30] sm:$0xf]
    %v1405 = vld [vmem:[%s1391 + $0x34] sm:$0xf]
    %v1406 = vld [vmem:[%s1391 + $0x38] sm:$0xf]
    %v1407 = vld [vmem:[%s1391 + $0x3c] sm:$0xf]
    %v1424 = vunpack.c.l.b16 %v1392
    %v1425 = vunpack.c.l.b16 %v1393
    %v1426 = vunpack.c.l.b16 %v1394
    %v1427 = vunpack.c.l.b16 %v1395
    %v1428 = vunpack.c.l.b16 %v1396
    %v1429 = vunpack.c.l.b16 %v1397
    %v1430 = vunpack.c.l.b16 %v1398
    %v1431 = vunpack.c.l.b16 %v1399
    %v1432 = vunpack.c.l.b16 %v1400
    %v1433 = vunpack.c.l.b16 %v1401
    %v1434 = vunpack.c.l.b16 %v1402
    %v1435 = vunpack.c.l.b16 %v1403
    %v1436 = vunpack.c.l.b16 %v1404
    %v1437 = vunpack.c.l.b16 %v1405
    %v1438 = vunpack.c.l.b16 %v1406
    %v1439 = vunpack.c.l.b16 %v1407
    %v1440 = vpack.c.b16 %v1425, %v1424
    %v1441 = vpack.c.b16 %v1427, %v1426
    %v1442 = vpack.c.b16 %v1429, %v1428
    %v1443 = vpack.c.b16 %v1431, %v1430
    %v1444 = vpack.c.b16 %v1433, %v1432
    %v1445 = vpack.c.b16 %v1435, %v1434
    %v1446 = vpack.c.b16 %v1437, %v1436
    %v1447 = vpack.c.b16 %v1439, %v1438
    %1456 = vmatpush.bf16.msra.mxu0 %v1447
    %1457 = vmatpush.bf16.msra.mxu0 %v1446
    %1458 = vmatpush.bf16.msra.mxu0 %v1445
    %1459 = vmatpush.bf16.msra.mxu0 %v1444
    %1460 = vmatpush.bf16.msra.mxu0 %v1443
    %1461 = vmatpush.bf16.msra.mxu0 %v1442
    %1462 = vmatpush.bf16.msra.mxu0 %v1441
    %1463 = vmatpush.bf16.msra.mxu0 %v1440
    %1464 = vmatmul.bf16.gmra.mxu0 %v1375
    %v1465 = vpop.f32.mrf.mxu0
    %v1466 = vadd.f32 0.0, %v1465
    %v1467 = vpop.f32.mrf.mxu0
    %v1468 = vadd.f32 0.0, %v1467
    %1469 = vmatmul.bf16.gmra.mxu0 %v1376
    %v1470 = vpop.f32.mrf.mxu0
    %v1471 = vadd.f32 0.0, %v1470
    %v1472 = vpop.f32.mrf.mxu0
    %v1473 = vadd.f32 0.0, %v1472
    %1474 = vmatmul.bf16.gmra.mxu0 %v1377
    %v1475 = vpop.f32.mrf.mxu0
    %v1476 = vadd.f32 0.0, %v1475
    %v1477 = vpop.f32.mrf.mxu0
    %v1478 = vadd.f32 0.0, %v1477
    %1479 = vmatmul.bf16.gmra.mxu0 %v1378
    %v1480 = vpop.f32.mrf.mxu0
    %v1481 = vadd.f32 0.0, %v1480
    %v1482 = vpop.f32.mrf.mxu0
    %v1483 = vadd.f32 0.0, %v1482
    %1484 = vmatmul.bf16.gmra.mxu0 %v1379
    %v1485 = vpop.f32.mrf.mxu0
    %v1486 = vadd.f32 0.0, %v1485
    %v1487 = vpop.f32.mrf.mxu0
    %v1488 = vadd.f32 0.0, %v1487
    %1489 = vmatmul.bf16.gmra.mxu0 %v1380
    %v1490 = vpop.f32.mrf.mxu0
    %v1491 = vadd.f32 0.0, %v1490
    %v1492 = vpop.f32.mrf.mxu0
    %v1493 = vadd.f32 0.0, %v1492
    %1494 = vmatmul.bf16.gmra.mxu0 %v1381
    %v1495 = vpop.f32.mrf.mxu0
    %v1496 = vadd.f32 0.0, %v1495
    %v1497 = vpop.f32.mrf.mxu0
    %v1498 = vadd.f32 0.0, %v1497
    %1499 = vmatmul.bf16.gmra.mxu0 %v1382
    %v1500 = vpop.f32.mrf.mxu0
    %v1501 = vadd.f32 0.0, %v1500
    %v1502 = vpop.f32.mrf.mxu0
    %v1503 = vadd.f32 0.0, %v1502
    %1504 = vmatmul.bf16.gmra.mxu0 %v1383
    %v1505 = vpop.f32.mrf.mxu0
    %v1506 = vadd.f32 0.0, %v1505
    %v1507 = vpop.f32.mrf.mxu0
    %v1508 = vadd.f32 0.0, %v1507
    %1509 = vmatmul.bf16.gmra.mxu0 %v1384
    %v1510 = vpop.f32.mrf.mxu0
    %v1511 = vadd.f32 0.0, %v1510
    %v1512 = vpop.f32.mrf.mxu0
    %v1513 = vadd.f32 0.0, %v1512
    %1514 = vmatmul.bf16.gmra.mxu0 %v1385
    %v1515 = vpop.f32.mrf.mxu0
    %v1516 = vadd.f32 0.0, %v1515
    %v1517 = vpop.f32.mrf.mxu0
    %v1518 = vadd.f32 0.0, %v1517
    %1519 = vmatmul.bf16.gmra.mxu0 %v1386
    %v1520 = vpop.f32.mrf.mxu0
    %v1521 = vadd.f32 0.0, %v1520
    %v1522 = vpop.f32.mrf.mxu0
    %v1523 = vadd.f32 0.0, %v1522
    %1524 = vmatmul.bf16.gmra.mxu0 %v1387
    %v1525 = vpop.f32.mrf.mxu0
    %v1526 = vadd.f32 0.0, %v1525
    %v1527 = vpop.f32.mrf.mxu0
    %v1528 = vadd.f32 0.0, %v1527
    %1529 = vmatmul.bf16.gmra.mxu0 %v1388
    %v1530 = vpop.f32.mrf.mxu0
    %v1531 = vadd.f32 0.0, %v1530
    %v1532 = vpop.f32.mrf.mxu0
    %v1533 = vadd.f32 0.0, %v1532
    %1534 = vmatmul.bf16.gmra.mxu0 %v1389
    %v1535 = vpop.f32.mrf.mxu0
    %v1536 = vadd.f32 0.0, %v1535
    %v1537 = vpop.f32.mrf.mxu0
    %v1538 = vadd.f32 0.0, %v1537
    %1539 = vmatmul.bf16.gmra.mxu0 %v1390
    %v1540 = vpop.f32.mrf.mxu0
    %v1541 = vadd.f32 0.0, %v1540
    %v1542 = vpop.f32.mrf.mxu0
    %v1543 = vadd.f32 0.0, %v1542
    %1544 = vdwg.mxu0
    %v1545 = vpack.c.bf16 %v1468, %v1466
    %v1546 = vpack.c.bf16 %v1473, %v1471
    %v1547 = vpack.c.bf16 %v1478, %v1476
    %v1548 = vpack.c.bf16 %v1483, %v1481
    %v1549 = vpack.c.bf16 %v1488, %v1486
    %v1550 = vpack.c.bf16 %v1493, %v1491
    %v1551 = vpack.c.bf16 %v1498, %v1496
    %v1552 = vpack.c.bf16 %v1503, %v1501
    %v1553 = vpack.c.bf16 %v1508, %v1506
    %v1554 = vpack.c.bf16 %v1513, %v1511
    %v1555 = vpack.c.bf16 %v1518, %v1516
    %v1556 = vpack.c.bf16 %v1523, %v1521
    %v1557 = vpack.c.bf16 %v1528, %v1526
    %v1558 = vpack.c.bf16 %v1533, %v1531
    %v1559 = vpack.c.bf16 %v1538, %v1536
    %v1560 = vpack.c.bf16 %v1543, %v1541
    %s1561 = scalar_lea.vmem [#allocation8], 2
    %v1562 = vld [vmem:[%s1561] sm:$0x1]
    %v1564 = vperm.slane %v1562, 0
    %1566 = vmatpush.bf16.msra.mxu0 %v1552
    %1567 = vmatpush.bf16.msra.mxu0 %v1551
    %1568 = vmatpush.bf16.msra.mxu0 %v1550
    %1569 = vmatpush.bf16.msra.mxu0 %v1549
    %1570 = vmatpush.bf16.msra.mxu0 %v1548
    %1571 = vmatpush.bf16.msra.mxu0 %v1547
    %1572 = vmatpush.bf16.msra.mxu0 %v1546
    %1573 = vmatpush.bf16.msra.mxu0 %v1545
    %1574 = vmatmul.bf16.gmra.mxu0 %v554
    %v1575 = vpop.f32.mrf.mxu0
    %v1576 = vadd.f32 %v1564, %v1575
    %v1577 = vpop.f32.mrf.mxu0
    %v1578 = vadd.f32 %v1564, %v1577
    %1579 = vmatmul.bf16.gmra.mxu0 %v556
    %v1580 = vpop.f32.mrf.mxu0
    %v1581 = vadd.f32 %v1564, %v1580
    %v1582 = vpop.f32.mrf.mxu0
    %v1583 = vadd.f32 %v1564, %v1582
    %1584 = vmatmul.bf16.gmra.mxu0 %v558
    %v1585 = vpop.f32.mrf.mxu0
    %v1586 = vadd.f32 %v1564, %v1585
    %v1587 = vpop.f32.mrf.mxu0
    %v1588 = vadd.f32 %v1564, %v1587
    %1589 = vmatmul.bf16.gmra.mxu0 %v560
    %v1590 = vpop.f32.mrf.mxu0
    %v1591 = vadd.f32 %v1564, %v1590
    %v1592 = vpop.f32.mrf.mxu0
    %v1593 = vadd.f32 %v1564, %v1592
    %1594 = vmatmul.bf16.gmra.mxu0 %v562
    %v1595 = vpop.f32.mrf.mxu0
    %v1596 = vadd.f32 %v1564, %v1595
    %v1597 = vpop.f32.mrf.mxu0
    %v1598 = vadd.f32 %v1564, %v1597
    %1599 = vmatmul.bf16.gmra.mxu0 %v564
    %v1600 = vpop.f32.mrf.mxu0
    %v1601 = vadd.f32 %v1564, %v1600
    %v1602 = vpop.f32.mrf.mxu0
    %v1603 = vadd.f32 %v1564, %v1602
    %1604 = vmatmul.bf16.gmra.mxu0 %v566
    %v1605 = vpop.f32.mrf.mxu0
    %v1606 = vadd.f32 %v1564, %v1605
    %v1607 = vpop.f32.mrf.mxu0
    %v1608 = vadd.f32 %v1564, %v1607
    %1609 = vmatmul.bf16.gmra.mxu0 %v568
    %v1610 = vpop.f32.mrf.mxu0
    %v1611 = vadd.f32 %v1564, %v1610
    %v1612 = vpop.f32.mrf.mxu0
    %v1613 = vadd.f32 %v1564, %v1612
    %1614 = vmatmul.bf16.gmra.mxu0 %v570
    %v1615 = vpop.f32.mrf.mxu0
    %v1616 = vadd.f32 %v1564, %v1615
    %v1617 = vpop.f32.mrf.mxu0
    %v1618 = vadd.f32 %v1564, %v1617
    %1619 = vmatmul.bf16.gmra.mxu0 %v572
    %v1620 = vpop.f32.mrf.mxu0
    %v1621 = vadd.f32 %v1564, %v1620
    %v1622 = vpop.f32.mrf.mxu0
    %v1623 = vadd.f32 %v1564, %v1622
    %1624 = vmatmul.bf16.gmra.mxu0 %v574
    %v1625 = vpop.f32.mrf.mxu0
    %v1626 = vadd.f32 %v1564, %v1625
    %v1627 = vpop.f32.mrf.mxu0
    %v1628 = vadd.f32 %v1564, %v1627
    %1629 = vmatmul.bf16.gmra.mxu0 %v576
    %v1630 = vpop.f32.mrf.mxu0
    %v1631 = vadd.f32 %v1564, %v1630
    %v1632 = vpop.f32.mrf.mxu0
    %v1633 = vadd.f32 %v1564, %v1632
    %1634 = vmatmul.bf16.gmra.mxu0 %v578
    %v1635 = vpop.f32.mrf.mxu0
    %v1636 = vadd.f32 %v1564, %v1635
    %v1637 = vpop.f32.mrf.mxu0
    %v1638 = vadd.f32 %v1564, %v1637
    %1639 = vmatmul.bf16.gmra.mxu0 %v580
    %v1640 = vpop.f32.mrf.mxu0
    %v1641 = vadd.f32 %v1564, %v1640
    %v1642 = vpop.f32.mrf.mxu0
    %v1643 = vadd.f32 %v1564, %v1642
    %1644 = vmatmul.bf16.gmra.mxu0 %v582
    %v1645 = vpop.f32.mrf.mxu0
    %v1646 = vadd.f32 %v1564, %v1645
    %v1647 = vpop.f32.mrf.mxu0
    %v1648 = vadd.f32 %v1564, %v1647
    %1649 = vmatmul.bf16.gmra.mxu0 %v584
    %v1650 = vpop.f32.mrf.mxu0
    %v1651 = vadd.f32 %v1564, %v1650
    %v1652 = vpop.f32.mrf.mxu0
    %v1653 = vadd.f32 %v1564, %v1652
    %1654 = vdwg.mxu0
    %1655 = vmatpush.bf16.msra.mxu0 %v1560
    %1656 = vmatpush.bf16.msra.mxu0 %v1559
    %1657 = vmatpush.bf16.msra.mxu0 %v1558
    %1658 = vmatpush.bf16.msra.mxu0 %v1557
    %1659 = vmatpush.bf16.msra.mxu0 %v1556
    %1660 = vmatpush.bf16.msra.mxu0 %v1555
    %1661 = vmatpush.bf16.msra.mxu0 %v1554
    %1662 = vmatpush.bf16.msra.mxu0 %v1553
    %1663 = vmatmul.bf16.gmra.mxu0 %v555
    %v1664 = vpop.f32.mrf.mxu0
    %v1665 = vadd.f32 %v1576, %v1664
    %v1666 = vpop.f32.mrf.mxu0
    %v1667 = vadd.f32 %v1578, %v1666
    %1668 = vmatmul.bf16.gmra.mxu0 %v557
    %v1669 = vpop.f32.mrf.mxu0
    %v1670 = vadd.f32 %v1581, %v1669
    %v1671 = vpop.f32.mrf.mxu0
    %v1672 = vadd.f32 %v1583, %v1671
    %1673 = vmatmul.bf16.gmra.mxu0 %v559
    %v1674 = vpop.f32.mrf.mxu0
    %v1675 = vadd.f32 %v1586, %v1674
    %v1676 = vpop.f32.mrf.mxu0
    %v1677 = vadd.f32 %v1588, %v1676
    %1678 = vmatmul.bf16.gmra.mxu0 %v561
    %v1679 = vpop.f32.mrf.mxu0
    %v1680 = vadd.f32 %v1591, %v1679
    %v1681 = vpop.f32.mrf.mxu0
    %v1682 = vadd.f32 %v1593, %v1681
    %1683 = vmatmul.bf16.gmra.mxu0 %v563
    %v1684 = vpop.f32.mrf.mxu0
    %v1685 = vadd.f32 %v1596, %v1684
    %v1686 = vpop.f32.mrf.mxu0
    %v1687 = vadd.f32 %v1598, %v1686
    %1688 = vmatmul.bf16.gmra.mxu0 %v565
    %v1689 = vpop.f32.mrf.mxu0
    %v1690 = vadd.f32 %v1601, %v1689
    %v1691 = vpop.f32.mrf.mxu0
    %v1692 = vadd.f32 %v1603, %v1691
    %1693 = vmatmul.bf16.gmra.mxu0 %v567
    %v1694 = vpop.f32.mrf.mxu0
    %v1695 = vadd.f32 %v1606, %v1694
    %v1696 = vpop.f32.mrf.mxu0
    %v1697 = vadd.f32 %v1608, %v1696
    %1698 = vmatmul.bf16.gmra.mxu0 %v569
    %v1699 = vpop.f32.mrf.mxu0
    %v1700 = vadd.f32 %v1611, %v1699
    %v1701 = vpop.f32.mrf.mxu0
    %v1702 = vadd.f32 %v1613, %v1701
    %1703 = vmatmul.bf16.gmra.mxu0 %v571
    %v1704 = vpop.f32.mrf.mxu0
    %v1705 = vadd.f32 %v1616, %v1704
    %v1706 = vpop.f32.mrf.mxu0
    %v1707 = vadd.f32 %v1618, %v1706
    %1708 = vmatmul.bf16.gmra.mxu0 %v573
    %v1709 = vpop.f32.mrf.mxu0
    %v1710 = vadd.f32 %v1621, %v1709
    %v1711 = vpop.f32.mrf.mxu0
    %v1712 = vadd.f32 %v1623, %v1711
    %1713 = vmatmul.bf16.gmra.mxu0 %v575
    %v1714 = vpop.f32.mrf.mxu0
    %v1715 = vadd.f32 %v1626, %v1714
    %v1716 = vpop.f32.mrf.mxu0
    %v1717 = vadd.f32 %v1628, %v1716
    %1718 = vmatmul.bf16.gmra.mxu0 %v577
    %v1719 = vpop.f32.mrf.mxu0
    %v1720 = vadd.f32 %v1631, %v1719
    %v1721 = vpop.f32.mrf.mxu0
    %v1722 = vadd.f32 %v1633, %v1721
    %1723 = vmatmul.bf16.gmra.mxu0 %v579
    %v1724 = vpop.f32.mrf.mxu0
    %v1725 = vadd.f32 %v1636, %v1724
    %v1726 = vpop.f32.mrf.mxu0
    %v1727 = vadd.f32 %v1638, %v1726
    %1728 = vmatmul.bf16.gmra.mxu0 %v581
    %v1729 = vpop.f32.mrf.mxu0
    %v1730 = vadd.f32 %v1641, %v1729
    %v1731 = vpop.f32.mrf.mxu0
    %v1732 = vadd.f32 %v1643, %v1731
    %1733 = vmatmul.bf16.gmra.mxu0 %v583
    %v1734 = vpop.f32.mrf.mxu0
    %v1735 = vadd.f32 %v1646, %v1734
    %v1736 = vpop.f32.mrf.mxu0
    %v1737 = vadd.f32 %v1648, %v1736
    %1738 = vmatmul.bf16.gmra.mxu0 %v585
    %v1739 = vpop.f32.mrf.mxu0
    %v1740 = vadd.f32 %v1651, %v1739
    %v1741 = vpop.f32.mrf.mxu0
    %v1742 = vadd.f32 %v1653, %v1741
    %1743 = vdwg.mxu0
    %v1744 = vpack.c.bf16 %v1667, %v1665
    %v1745 = vpack.c.bf16 %v1672, %v1670
    %v1746 = vpack.c.bf16 %v1677, %v1675
    %v1747 = vpack.c.bf16 %v1682, %v1680
    %v1748 = vpack.c.bf16 %v1687, %v1685
    %v1749 = vpack.c.bf16 %v1692, %v1690
    %v1750 = vpack.c.bf16 %v1697, %v1695
    %v1751 = vpack.c.bf16 %v1702, %v1700
    %v1752 = vpack.c.bf16 %v1707, %v1705
    %v1753 = vpack.c.bf16 %v1712, %v1710
    %v1754 = vpack.c.bf16 %v1717, %v1715
    %v1755 = vpack.c.bf16 %v1722, %v1720
    %v1756 = vpack.c.bf16 %v1727, %v1725
    %v1757 = vpack.c.bf16 %v1732, %v1730
    %v1758 = vpack.c.bf16 %v1737, %v1735
    %v1759 = vpack.c.bf16 %v1742, %v1740
    %v1760 = vld [vmem:[#allocation10] sm:$0xff]
    %v1762 = vunpack.c.l.b16 %v1760
    %v1763 = vunpack.c.h.b16 %v1760
    %v1764 = vpack.c.b16 %v1762, %v1762
    %v1765 = vpack.c.b16 %v1763, %v1763
    %1768 = vmatpush.bf16.msra.mxu0 %v1751
    %1769 = vmatpush.bf16.msra.mxu0 %v1750
    %1770 = vmatpush.bf16.msra.mxu0 %v1749
    %1771 = vmatpush.bf16.msra.mxu0 %v1748
    %1772 = vmatpush.bf16.msra.mxu0 %v1747
    %1773 = vmatpush.bf16.msra.mxu0 %v1746
    %1774 = vmatpush.bf16.msra.mxu0 %v1745
    %1775 = vmatpush.bf16.msra.mxu0 %v1744
    %1776 = vmatmul.bf16.gmra.mxu0 %v1764
    %v1777 = vpop.f32.mrf.mxu0
    %v1778 = vadd.f32 0.0, %v1777
    %v1779 = vpop.f32.mrf.mxu0
    %1780 = vdwg.mxu0
    %1781 = vmatpush.bf16.msra.mxu0 %v1759
    %1782 = vmatpush.bf16.msra.mxu0 %v1758
    %1783 = vmatpush.bf16.msra.mxu0 %v1757
    %1784 = vmatpush.bf16.msra.mxu0 %v1756
    %1785 = vmatpush.bf16.msra.mxu0 %v1755
    %1786 = vmatpush.bf16.msra.mxu0 %v1754
    %1787 = vmatpush.bf16.msra.mxu0 %v1753
    %1788 = vmatpush.bf16.msra.mxu0 %v1752
    %1789 = vmatmul.bf16.gmra.mxu0 %v1765
    %v1790 = vpop.f32.mrf.mxu0
    %v1791 = vadd.f32 %v1778, %v1790
    %v1792 = vpop.f32.mrf.mxu0
    %1793 = vdwg.mxu0
    %v1794 = vpack.c.bf16 %v1791, %v1791
    %v1795 = vld [vmem:[#allocation11] sm:$0xf]
    %v1796 = vld [vmem:[#allocation11 + $0x4] sm:$0xf]
    %v1797 = vld [vmem:[#allocation11 + $0x8] sm:$0xf]
    %v1798 = vld [vmem:[#allocation11 + $0xc] sm:$0xf]
    %v1799 = vld [vmem:[#allocation11 + $0x10] sm:$0xf]
    %v1800 = vld [vmem:[#allocation11 + $0x14] sm:$0xf]
    %v1801 = vld [vmem:[#allocation11 + $0x18] sm:$0xf]
    %v1802 = vld [vmem:[#allocation11 + $0x1c] sm:$0xf]
    %v1803 = vld [vmem:[#allocation11 + $0x20] sm:$0xf]
    %v1804 = vld [vmem:[#allocation11 + $0x24] sm:$0xf]
    %v1805 = vld [vmem:[#allocation11 + $0x28] sm:$0xf]
    %v1806 = vld [vmem:[#allocation11 + $0x2c] sm:$0xf]
    %v1807 = vld [vmem:[#allocation11 + $0x30] sm:$0xf]
    %v1808 = vld [vmem:[#allocation11 + $0x34] sm:$0xf]
    %v1809 = vld [vmem:[#allocation11 + $0x38] sm:$0xf]
    %v1810 = vld [vmem:[#allocation11 + $0x3c] sm:$0xf]
    %v1811 = vld [vmem:[%s8] sm:$0x1]
    %v1813 = vperm.slane %v1811, 0
    %v1831 = vunpack.c.l.b16 %v1795
    %v1832 = vunpack.c.l.b16 %v1796
    %v1833 = vunpack.c.l.b16 %v1797
    %v1834 = vunpack.c.l.b16 %v1798
    %v1835 = vunpack.c.l.b16 %v1799
    %v1836 = vunpack.c.l.b16 %v1800
    %v1837 = vunpack.c.l.b16 %v1801
    %v1838 = vunpack.c.l.b16 %v1802
    %v1839 = vunpack.c.l.b16 %v1803
    %v1840 = vunpack.c.l.b16 %v1804
    %v1841 = vunpack.c.l.b16 %v1805
    %v1842 = vunpack.c.l.b16 %v1806
    %v1843 = vunpack.c.l.b16 %v1807
    %v1844 = vunpack.c.l.b16 %v1808
    %v1845 = vunpack.c.l.b16 %v1809
    %v1846 = vunpack.c.l.b16 %v1810
    %v1847 = vpack.c.b16 %v1832, %v1831
    %v1848 = vpack.c.b16 %v1834, %v1833
    %v1849 = vpack.c.b16 %v1836, %v1835
    %v1850 = vpack.c.b16 %v1838, %v1837
    %v1851 = vpack.c.b16 %v1840, %v1839
    %v1852 = vpack.c.b16 %v1842, %v1841
    %v1853 = vpack.c.b16 %v1844, %v1843
    %v1854 = vpack.c.b16 %v1846, %v1845
    %1863 = vmatpush.bf16.msra.mxu0 %v1854
    %1864 = vmatpush.bf16.msra.mxu0 %v1853
    %1865 = vmatpush.bf16.msra.mxu0 %v1852
    %1866 = vmatpush.bf16.msra.mxu0 %v1851
    %1867 = vmatpush.bf16.msra.mxu0 %v1850
    %1868 = vmatpush.bf16.msra.mxu0 %v1849
    %1869 = vmatpush.bf16.msra.mxu0 %v1848
    %1870 = vmatpush.bf16.msra.mxu0 %v1847
    %1871 = vmatmul.bf16.gmra.mxu0 %v1794
    %v1872 = vpop.f32.mrf.mxu0
    %v1873 = vadd.f32 %v1813, %v1872
    %v1874 = vpop.f32.mrf.mxu0
    %1875 = vdwg.mxu0
    %1876 = vst [vmem:[#allocation13] sm:$0xff] %v1873
    // Predicated region
    $region62: #{tpu_custom_call.1} parent=1 // pred_check
      _
    $region63: #{tpu_custom_call.1} parent=1 // pred_check_branch
      %1878 = sbr.rel (0) target = $region65
    $region64: #{tpu_custom_call.1} parent=1 // pred_region
      %1880 = vsyncadd [#allocation4], 0
      %s1882 = sshll.u32 [#allocation13], 4
      %s1883 = int_to_ptr.vmem [resolvable:$true] %s1882
      %s1884 = sshll.u32 %s9, 4
      %s1885 = int_to_ptr.hbm [resolvable:$true] %s1884
      %1887 = dma.vmem_to_hbm [thread:$0]  %s1883, 128, %s1885, [#allocation4]
    $region65: #{tpu_custom_call.1} parent=1 // pred_fallthru
      _
    // Predicated region
    $region66: #{tpu_custom_call.1} parent=1 // pred_check
      _
    $region67: #{tpu_custom_call.1} parent=1 // pred_check_branch
      %1889 = sbr.rel (0) target = $region69
    $region68: #{tpu_custom_call.1} parent=1 // pred_region
      %1891 = dma.done [#allocation4], 128
    $region69: #{tpu_custom_call.1} parent=1 // pred_fallthru
      _
    %1892 = vsyncpa [#allocation3], 1
    %1893 = vsyncpa [#allocation6], 1
    %1894 = vsyncpa [#allocation9], 1
    %1895 = vsyncpa [#allocation12], 1
    %1896 = vsyncpa [#allocation4], 1

</llo_original>
